<compile_context>
chip_gen: v7x
topology: tpu7x:2x2x1
jax: 0.10.0
libtpu: 0.0.40
codegen_flags: <defaults>
</compile_context>

<pallas_src>
import jax
import jax.numpy as jnp
from jax.experimental import pallas as pl
from jax.experimental.pallas import tpu as pltpu  # noqa: F401  (not needed at this size)

# Static network dimensions (MNIST-like, small).
C1, C2 = 4, 8                      # conv1 / conv2 output channels
H1 = W1 = 16                       # conv1 spatial (input 16x16, 'same' padding)
H2 = W2 = 8                        # after pool1
H3 = W3 = 4                        # after pool2
FC1_IN, FC1_OUT = C2 * H3 * W3, 32  # 128 -> 32
FC2_OUT, FC3_OUT = 32, 10


# ---------------- fused Pallas kernel (entire forward pass) ----------------

def _mnist_fused_kernel(xp_ref,                     # [N*18, 18]   padded input, rows = n*18+y
                        sel1_ref, band1_ref, b1_ref,    # [3,N*16,N*18], [3,18,64], [1,64]
                        row1_ref, col1_ref,             # [2,N*10,N*16], [2,64,40]
                        sel2_ref, band2_ref, b2_ref,    # [3,N*8,N*10], [3,40,64], [1,64]
                        row2_ref, col2_ref,             # [2,N*4,N*8],  [2,64,32]
                        w1r_ref, fc1b_ref,              # [4,32,32], [1,32]
                        fc2w_ref, fc2b_ref,             # [32,32], [1,32]
                        fc3w_ref, fc3b_ref,             # [32,10], [1,10]
                        out_ref):                       # [N, 10]
    f32 = jnp.float32

    def dot(a, b):
        return jnp.dot(a, b, preferred_element_type=f32)

    xp = xp_ref[...]                                            # [N*18, 18]

    # ---- conv1 + ReLU: vertical-tap row selection + banded horizontal conv (MXU) ----
    y1 = dot(dot(sel1_ref[0], xp), band1_ref[0])
    y1 = y1 + dot(dot(sel1_ref[1], xp), band1_ref[1])
    y1 = y1 + dot(dot(sel1_ref[2], xp), band1_ref[2])
    y1 = jnp.maximum(y1 + b1_ref[...], 0.0)                     # [N*16, 64] lane = x*C1+c

    # ---- pool1 (2x2/2) fused with conv2's zero border: even/odd row & lane selects ----
    v1 = jnp.maximum(dot(row1_ref[0], y1), dot(row1_ref[1], y1))    # [N*10, 64]
    x2 = jnp.maximum(dot(v1, col1_ref[0]), dot(v1, col1_ref[1]))    # [N*10, 40]

    # ---- conv2 + ReLU ----
    y2 = dot(dot(sel2_ref[0], x2), band2_ref[0])
    y2 = y2 + dot(dot(sel2_ref[1], x2), band2_ref[1])
    y2 = y2 + dot(dot(sel2_ref[2], x2), band2_ref[2])
    y2 = jnp.maximum(y2 + b2_ref[...], 0.0)                     # [N*8, 64] lane = x*C2+c

    # ---- pool2 (2x2/2); output rows in y-major order (row = y*N + n) ----
    v2 = jnp.maximum(dot(row2_ref[0], y2), dot(row2_ref[1], y2))    # [N*4, 64]
    p2 = jnp.maximum(dot(v2, col2_ref[0]), dot(v2, col2_ref[1]))    # [N*4, 32]

    # ---- fc1 (NCHW flatten folded into per-y weight slabs) + ReLU, fc2 + ReLU, fc3 ----
    nb = out_ref.shape[0]
    h = fc1b_ref[...]
    for y in range(H3):                                         # 4 batched [N,32]x[32,32]
        h = h + dot(p2[y * nb:(y + 1) * nb, :], w1r_ref[y])
    h = jnp.maximum(h, 0.0)                                     # [N, 32]
    h = jnp.maximum(dot(h, fc2w_ref[...]) + fc2b_ref[...], 0.0)  # [N, 32]
    out_ref[...] = dot(h, fc3w_ref[...]) + fc3b_ref[...]        # single batched store


# ---------------- wrapper: build selection / band matrices, call the kernel ----------------

def _one_hot_rows(src_col, n_cols, valid=None):
    """0/1 matrix M with M[r, src_col[r]] = 1 (where valid)."""
    m = jnp.arange(n_cols)[None, :] == src_col[:, None]
    if valid is not None:
        m = m & valid[:, None]
    return m.astype(jnp.float32)


def mnist_forward(x, params):
    """Fused forward pass: one pallas_call, all activations stay in VMEM."""
    f32 = jnp.float32
    n = x.shape[0]

    # --- input: zero-pad and fold batch onto the sublane axis ---
    xp2d = jnp.pad(x[:, 0, :, :].astype(f32), ((0, 0), (1, 1), (1, 1)))
    xp2d = xp2d.reshape(n * (H1 + 2), W1 + 2)                           # [N*18, 18]

    # --- conv1: vertical-tap selection + banded horizontal conv (with channel expand) ---
    w1 = params["conv1_w"].astype(f32)                                  # [C1, 1, 3, 3]
    r1 = jnp.arange(n * H1)
    base1 = (r1 // H1) * (H1 + 2) + (r1 % H1)
    sel1 = jnp.stack([_one_hot_rows(base1 + i, n * (H1 + 2)) for i in range(3)])
    d1 = jnp.arange(W1 + 2)[:, None] - jnp.arange(W1)[None, :]          # x_pad - x
    jhot1 = (d1[:, :, None] == jnp.arange(3)).astype(f32)               # [18,16,3]
    band1 = jnp.einsum("pxj,ijc->ipxc", jhot1,
                       jnp.transpose(w1[:, 0], (1, 2, 0)))
    band1 = band1.reshape(3, W1 + 2, W1 * C1)                           # [3,18,64]
    b1 = jnp.tile(params["conv1_b"].astype(f32), W1).reshape(1, W1 * C1)

    # --- pool1 (2x2/2) + conv2 zero border, as even/odd row & lane selection matrices ---
    rp1 = jnp.arange(n * (H2 + 2))
    n_r1, r_pad1 = rp1 // (H2 + 2), rp1 % (H2 + 2)
    ok1 = (r_pad1 >= 1) & (r_pad1 <= H2)
    src1 = n_r1 * H1 + 2 * (r_pad1 - 1)
    row1 = jnp.stack([_one_hot_rows(src1, n * H1, ok1),
                      _one_hot_rows(src1 + 1, n * H1, ok1)])            # [2,N*10,N*16]

    def col_mat(xi, ci, xo_src, co, ok):
        return ((xi[:, None] == xo_src[None, :]) & (ci[:, None] == co[None, :])
                & ok[None, :]).astype(f32)

    li1 = jnp.arange(W1 * C1); xi1, ci1 = li1 // C1, li1 % C1
    lo1 = jnp.arange((W2 + 2) * C1); xo1, co1 = lo1 // C1, lo1 % C1
    okc1 = (xo1 >= 1) & (xo1 <= W2)
    col1 = jnp.stack([col_mat(xi1, ci1, 2 * (xo1 - 1), co1, okc1),
                      col_mat(xi1, ci1, 2 * (xo1 - 1) + 1, co1, okc1)])  # [2,64,40]

    # --- conv2: vertical-tap selection + banded horizontal conv (4->8 channels) ---
    w2 = params["conv2_w"].astype(f32)                                  # [C2, C1, 3, 3]
    r2 = jnp.arange(n * H2)
    base2 = (r2 // H2) * (H2 + 2) + (r2 % H2)
    sel2 = jnp.stack([_one_hot_rows(base2 + i, n * (H2 + 2)) for i in range(3)])
    d2 = jnp.arange(W2 + 2)[:, None] - jnp.arange(W2)[None, :]
    jhot2 = (d2[:, :, None] == jnp.arange(3)).astype(f32)               # [10,8,3]
    band2 = jnp.einsum("pxj,ijdo->ipdxo", jhot2,
                       jnp.transpose(w2, (2, 3, 1, 0)))
    band2 = band2.reshape(3, (W2 + 2) * C1, W2 * C2)                    # [3,40,64]
    b2 = jnp.tile(params["conv2_b"].astype(f32), W2).reshape(1, W2 * C2)

    # --- pool2 (2x2/2); output rows y-major (row = y*N + n) so fc1 needs no reshape ---
    rp2 = jnp.arange(H3 * n)
    y3, n3 = rp2 // n, rp2 % n
    src2 = n3 * H2 + 2 * y3
    row2 = jnp.stack([_one_hot_rows(src2, n * H2),
                      _one_hot_rows(src2 + 1, n * H2)])                 # [2,N*4,N*8]
    li2 = jnp.arange(W2 * C2); xi2, ci2 = li2 // C2, li2 % C2
    lo2 = jnp.arange(W3 * C2); xo2, co2 = lo2 // C2, lo2 % C2
    ok_all = jnp.ones_like(lo2, dtype=bool)
    col2 = jnp.stack([col_mat(xi2, ci2, 2 * xo2, co2, ok_all),
                      col_mat(xi2, ci2, 2 * xo2 + 1, co2, ok_all)])     # [2,64,32]

    # --- fc weights: fold the NCHW flatten into per-row (y) slabs matching lane=x*C2+c ---
    w1r = params["fc1_w"].astype(f32).reshape(C2, H3, W3, FC1_OUT)
    w1r = jnp.transpose(w1r, (1, 2, 0, 3)).reshape(H3, W3 * C2, FC1_OUT)  # [4,32,32]
    fc1b = params["fc1_b"].reshape(1, FC1_OUT).astype(f32)
    fc2w = params["fc2_w"].astype(f32)
    fc2b = params["fc2_b"].reshape(1, FC2_OUT).astype(f32)
    fc3w = params["fc3_w"].astype(f32)
    fc3b = params["fc3_b"].reshape(1, FC3_OUT).astype(f32)

    args = (xp2d, sel1, band1, b1, row1, col1,
            sel2, band2, b2, row2, col2,
            w1r, fc1b, fc2w, fc2b, fc3w, fc3b)

    def vmem(shape):
        return pl.BlockSpec(shape, lambda: (0,) * len(shape))

    return pl.pallas_call(
        _mnist_fused_kernel,
        out_shape=jax.ShapeDtypeStruct((n, FC3_OUT), f32),
        in_specs=[vmem(a.shape) for a in args],
        out_specs=vmem((n, FC3_OUT)),
    )(*args)


# ---------------- params / reference / main ----------------

def init_params(key):
    ks = jax.random.split(key, 10)

    def nrm(k, shape, scale=0.1):
        return (scale * jax.random.normal(k, shape)).astype(jnp.float32)

    return {
        # conv weights in PyTorch layout [Cout, Cin, KH, KW]
        "conv1_w": nrm(ks[0], (C1, 1, 3, 3)),
        "conv1_b": nrm(ks[1], (C1,)),
        "conv2_w": nrm(ks[2], (C2, C1, 3, 3)),
        "conv2_b": nrm(ks[3], (C2,)),
        # fc weights stored as [in, out] (transposed vs PyTorch)
        "fc1_w": nrm(ks[4], (FC1_IN, FC1_OUT)),
        "fc1_b": nrm(ks[5], (FC1_OUT,)),
        "fc2_w": nrm(ks[6], (FC1_OUT, FC2_OUT)),
        "fc2_b": nrm(ks[7], (FC2_OUT,)),
        "fc3_w": nrm(ks[8], (FC2_OUT, FC3_OUT)),
        "fc3_b": nrm(ks[9], (FC3_OUT,)),
    }


def mnist_reference(x, params):
    """Pure-JAX reference of the PyTorch forward, used for a correctness check."""
    dn = ("NCHW", "OIHW", "NCHW")
    hp = jax.lax.Precision.HIGHEST
    y = jax.lax.conv_general_dilated(x, params["conv1_w"], (1, 1), ((1, 1), (1, 1)),
                                     dimension_numbers=dn, precision=hp)
    y = jax.nn.relu(y + params["conv1_b"][None, :, None, None])
    n, c, h, w = y.shape
    y = y.reshape(n, c, h // 2, 2, w // 2, 2).max(axis=(3, 5))
    y = jax.lax.conv_general_dilated(y, params["conv2_w"], (1, 1), ((1, 1), (1, 1)),
                                     dimension_numbers=dn, precision=hp)
    y = jax.nn.relu(y + params["conv2_b"][None, :, None, None])
    n, c, h, w = y.shape
    y = y.reshape(n, c, h // 2, 2, w // 2, 2).max(axis=(3, 5))
    y = y.reshape(n, -1)
    y = jax.nn.relu(jnp.dot(y, params["fc1_w"], precision=hp) + params["fc1_b"])
    y = jax.nn.relu(jnp.dot(y, params["fc2_w"], precision=hp) + params["fc2_b"])
    return jnp.dot(y, params["fc3_w"], precision=hp) + params["fc3_b"]


if __name__ == "__main__":
    key = jax.random.PRNGKey(0)
    k_param, k_x = jax.random.split(key)
    params = init_params(k_param)
    # Small MNIST-like input: batch=2, 1 channel, 16x16 spatial (NCHW)
    x = jax.random.normal(k_x, (2, 1, 16, 16), dtype=jnp.float32)

    fwd = jax.jit(mnist_forward)
    logits = fwd(x, params)
    jax.block_until_ready(logits)
    assert logits.shape == (2, FC3_OUT) and logits.dtype == jnp.float32

    ref = jax.jit(mnist_reference)(x, params)
    err = float(jnp.max(jnp.abs(logits - ref)))
    assert err < 5e-3, f"max abs error vs reference: {err}"
    print("KERNEL_OK")
</pallas_src>

<mosaic_0001>
module attributes {stable_mosaic.version = 11 : i64} {
  func.func @_mnist_fused_kernel(%arg0: memref<36x18xf32, #tpu.memory_space<vmem>>, %arg1: memref<3x32x36xf32, #tpu.memory_space<vmem>>, %arg2: memref<3x18x64xf32, #tpu.memory_space<vmem>>, %arg3: memref<1x64xf32, #tpu.memory_space<vmem>>, %arg4: memref<2x20x32xf32, #tpu.memory_space<vmem>>, %arg5: memref<2x64x40xf32, #tpu.memory_space<vmem>>, %arg6: memref<3x16x20xf32, #tpu.memory_space<vmem>>, %arg7: memref<3x40x64xf32, #tpu.memory_space<vmem>>, %arg8: memref<1x64xf32, #tpu.memory_space<vmem>>, %arg9: memref<2x8x16xf32, #tpu.memory_space<vmem>>, %arg10: memref<2x64x32xf32, #tpu.memory_space<vmem>>, %arg11: memref<4x32x32xf32, #tpu.memory_space<vmem>>, %arg12: memref<1x32xf32, #tpu.memory_space<vmem>>, %arg13: memref<32x32xf32, #tpu.memory_space<vmem>>, %arg14: memref<1x32xf32, #tpu.memory_space<vmem>>, %arg15: memref<32x10xf32, #tpu.memory_space<vmem>>, %arg16: memref<1x10xf32, #tpu.memory_space<vmem>>, %arg17: memref<2x10xf32, #tpu.memory_space<vmem>>) attributes {dimension_semantics = [], scalar_prefetch = 0 : i64, scratch_operands = 0 : i64, tpu.core_type = #tpu.core_type<tc>} {
    %c0 = arith.constant 0 : index
    %c0_0 = arith.constant 0 : index
    %0 = vector.load %arg0[%c0, %c0_0] : memref<36x18xf32, #tpu.memory_space<vmem>>, vector<36x18xf32>
    %c0_1 = arith.constant 0 : index
    %c0_2 = arith.constant 0 : index
    %c0_3 = arith.constant 0 : index
    %1 = vector.load %arg1[%c0_1, %c0_2, %c0_3] : memref<3x32x36xf32, #tpu.memory_space<vmem>>, vector<1x32x36xf32>
    %2 = vector.shape_cast %1 : vector<1x32x36xf32> to vector<32x36xf32>
    %cst = arith.constant dense<0.000000e+00> : vector<32x18xf32>
    %3 = tpu.matmul %2, %0, %cst {dimension_numbers = #tpu.dot_dimension_numbers<[1], [0], [0], [1], [0, 0, 1, 1], [], []>} : vector<32x36xf32>, vector<36x18xf32>, vector<32x18xf32> -> vector<32x18xf32>
    %c0_4 = arith.constant 0 : index
    %c0_5 = arith.constant 0 : index
    %c0_6 = arith.constant 0 : index
    %4 = vector.load %arg2[%c0_4, %c0_5, %c0_6] : memref<3x18x64xf32, #tpu.memory_space<vmem>>, vector<1x18x64xf32>
    %5 = vector.shape_cast %4 : vector<1x18x64xf32> to vector<18x64xf32>
    %cst_7 = arith.constant dense<0.000000e+00> : vector<32x64xf32>
    %6 = tpu.matmul %3, %5, %cst_7 {dimension_numbers = #tpu.dot_dimension_numbers<[1], [0], [0], [1], [0, 0, 1, 1], [], []>} : vector<32x18xf32>, vector<18x64xf32>, vector<32x64xf32> -> vector<32x64xf32>
    %c1 = arith.constant 1 : index
    %c0_8 = arith.constant 0 : index
    %c0_9 = arith.constant 0 : index
    %7 = vector.load %arg1[%c1, %c0_8, %c0_9] : memref<3x32x36xf32, #tpu.memory_space<vmem>>, vector<1x32x36xf32>
    %8 = vector.shape_cast %7 : vector<1x32x36xf32> to vector<32x36xf32>
    %cst_10 = arith.constant dense<0.000000e+00> : vector<32x18xf32>
    %9 = tpu.matmul %8, %0, %cst_10 {dimension_numbers = #tpu.dot_dimension_numbers<[1], [0], [0], [1], [0, 0, 1, 1], [], []>} : vector<32x36xf32>, vector<36x18xf32>, vector<32x18xf32> -> vector<32x18xf32>
    %c1_11 = arith.constant 1 : index
    %c0_12 = arith.constant 0 : index
    %c0_13 = arith.constant 0 : index
    %10 = vector.load %arg2[%c1_11, %c0_12, %c0_13] : memref<3x18x64xf32, #tpu.memory_space<vmem>>, vector<1x18x64xf32>
    %11 = vector.shape_cast %10 : vector<1x18x64xf32> to vector<18x64xf32>
    %cst_14 = arith.constant dense<0.000000e+00> : vector<32x64xf32>
    %12 = tpu.matmul %9, %11, %cst_14 {dimension_numbers = #tpu.dot_dimension_numbers<[1], [0], [0], [1], [0, 0, 1, 1], [], []>} : vector<32x18xf32>, vector<18x64xf32>, vector<32x64xf32> -> vector<32x64xf32>
    %13 = arith.addf %6, %12 : vector<32x64xf32>
    %c2 = arith.constant 2 : index
    %c0_15 = arith.constant 0 : index
    %c0_16 = arith.constant 0 : index
    %14 = vector.load %arg1[%c2, %c0_15, %c0_16] : memref<3x32x36xf32, #tpu.memory_space<vmem>>, vector<1x32x36xf32>
    %15 = vector.shape_cast %14 : vector<1x32x36xf32> to vector<32x36xf32>
    %cst_17 = arith.constant dense<0.000000e+00> : vector<32x18xf32>
    %16 = tpu.matmul %15, %0, %cst_17 {dimension_numbers = #tpu.dot_dimension_numbers<[1], [0], [0], [1], [0, 0, 1, 1], [], []>} : vector<32x36xf32>, vector<36x18xf32>, vector<32x18xf32> -> vector<32x18xf32>
    %c2_18 = arith.constant 2 : index
    %c0_19 = arith.constant 0 : index
    %c0_20 = arith.constant 0 : index
    %17 = vector.load %arg2[%c2_18, %c0_19, %c0_20] : memref<3x18x64xf32, #tpu.memory_space<vmem>>, vector<1x18x64xf32>
    %18 = vector.shape_cast %17 : vector<1x18x64xf32> to vector<18x64xf32>
    %cst_21 = arith.constant dense<0.000000e+00> : vector<32x64xf32>
    %19 = tpu.matmul %16, %18, %cst_21 {dimension_numbers = #tpu.dot_dimension_numbers<[1], [0], [0], [1], [0, 0, 1, 1], [], []>} : vector<32x18xf32>, vector<18x64xf32>, vector<32x64xf32> -> vector<32x64xf32>
    %20 = arith.addf %13, %19 : vector<32x64xf32>
    %c0_22 = arith.constant 0 : index
    %c0_23 = arith.constant 0 : index
    %21 = vector.load %arg3[%c0_22, %c0_23] : memref<1x64xf32, #tpu.memory_space<vmem>>, vector<1x64xf32>
    %22 = vector.broadcast %21 : vector<1x64xf32> to vector<32x64xf32>
    %23 = arith.addf %20, %22 : vector<32x64xf32>
    %cst_24 = arith.constant 0.000000e+00 : f32
    %24 = vector.broadcast %cst_24 : f32 to vector<32x64xf32>
    %25 = arith.maximumf %23, %24 : vector<32x64xf32>
    %c0_25 = arith.constant 0 : index
    %c0_26 = arith.constant 0 : index
    %c0_27 = arith.constant 0 : index
    %26 = vector.load %arg4[%c0_25, %c0_26, %c0_27] : memref<2x20x32xf32, #tpu.memory_space<vmem>>, vector<1x20x32xf32>
    %27 = vector.shape_cast %26 : vector<1x20x32xf32> to vector<20x32xf32>
    %cst_28 = arith.constant dense<0.000000e+00> : vector<20x64xf32>
    %28 = tpu.matmul %27, %25, %cst_28 {dimension_numbers = #tpu.dot_dimension_numbers<[1], [0], [0], [1], [0, 0, 1, 1], [], []>} : vector<20x32xf32>, vector<32x64xf32>, vector<20x64xf32> -> vector<20x64xf32>
    %c1_29 = arith.constant 1 : index
    %c0_30 = arith.constant 0 : index
    %c0_31 = arith.constant 0 : index
    %29 = vector.load %arg4[%c1_29, %c0_30, %c0_31] : memref<2x20x32xf32, #tpu.memory_space<vmem>>, vector<1x20x32xf32>
    %30 = vector.shape_cast %29 : vector<1x20x32xf32> to vector<20x32xf32>
    %cst_32 = arith.constant dense<0.000000e+00> : vector<20x64xf32>
    %31 = tpu.matmul %30, %25, %cst_32 {dimension_numbers = #tpu.dot_dimension_numbers<[1], [0], [0], [1], [0, 0, 1, 1], [], []>} : vector<20x32xf32>, vector<32x64xf32>, vector<20x64xf32> -> vector<20x64xf32>
    %32 = arith.maximumf %28, %31 : vector<20x64xf32>
    %c0_33 = arith.constant 0 : index
    %c0_34 = arith.constant 0 : index
    %c0_35 = arith.constant 0 : index
    %33 = vector.load %arg5[%c0_33, %c0_34, %c0_35] : memref<2x64x40xf32, #tpu.memory_space<vmem>>, vector<1x64x40xf32>
    %34 = vector.shape_cast %33 : vector<1x64x40xf32> to vector<64x40xf32>
    %cst_36 = arith.constant dense<0.000000e+00> : vector<20x40xf32>
    %35 = tpu.matmul %32, %34, %cst_36 {dimension_numbers = #tpu.dot_dimension_numbers<[1], [0], [0], [1], [0, 0, 1, 1], [], []>} : vector<20x64xf32>, vector<64x40xf32>, vector<20x40xf32> -> vector<20x40xf32>
    %c1_37 = arith.constant 1 : index
    %c0_38 = arith.constant 0 : index
    %c0_39 = arith.constant 0 : index
    %36 = vector.load %arg5[%c1_37, %c0_38, %c0_39] : memref<2x64x40xf32, #tpu.memory_space<vmem>>, vector<1x64x40xf32>
    %37 = vector.shape_cast %36 : vector<1x64x40xf32> to vector<64x40xf32>
    %cst_40 = arith.constant dense<0.000000e+00> : vector<20x40xf32>
    %38 = tpu.matmul %32, %37, %cst_40 {dimension_numbers = #tpu.dot_dimension_numbers<[1], [0], [0], [1], [0, 0, 1, 1], [], []>} : vector<20x64xf32>, vector<64x40xf32>, vector<20x40xf32> -> vector<20x40xf32>
    %39 = arith.maximumf %35, %38 : vector<20x40xf32>
    %c0_41 = arith.constant 0 : index
    %c0_42 = arith.constant 0 : index
    %c0_43 = arith.constant 0 : index
    %40 = vector.load %arg6[%c0_41, %c0_42, %c0_43] : memref<3x16x20xf32, #tpu.memory_space<vmem>>, vector<1x16x20xf32>
    %41 = vector.shape_cast %40 : vector<1x16x20xf32> to vector<16x20xf32>
    %cst_44 = arith.constant dense<0.000000e+00> : vector<16x40xf32>
    %42 = tpu.matmul %41, %39, %cst_44 {dimension_numbers = #tpu.dot_dimension_numbers<[1], [0], [0], [1], [0, 0, 1, 1], [], []>} : vector<16x20xf32>, vector<20x40xf32>, vector<16x40xf32> -> vector<16x40xf32>
    %c0_45 = arith.constant 0 : index
    %c0_46 = arith.constant 0 : index
    %c0_47 = arith.constant 0 : index
    %43 = vector.load %arg7[%c0_45, %c0_46, %c0_47] : memref<3x40x64xf32, #tpu.memory_space<vmem>>, vector<1x40x64xf32>
    %44 = vector.shape_cast %43 : vector<1x40x64xf32> to vector<40x64xf32>
    %cst_48 = arith.constant dense<0.000000e+00> : vector<16x64xf32>
    %45 = tpu.matmul %42, %44, %cst_48 {dimension_numbers = #tpu.dot_dimension_numbers<[1], [0], [0], [1], [0, 0, 1, 1], [], []>} : vector<16x40xf32>, vector<40x64xf32>, vector<16x64xf32> -> vector<16x64xf32>
    %c1_49 = arith.constant 1 : index
    %c0_50 = arith.constant 0 : index
    %c0_51 = arith.constant 0 : index
    %46 = vector.load %arg6[%c1_49, %c0_50, %c0_51] : memref<3x16x20xf32, #tpu.memory_space<vmem>>, vector<1x16x20xf32>
    %47 = vector.shape_cast %46 : vector<1x16x20xf32> to vector<16x20xf32>
    %cst_52 = arith.constant dense<0.000000e+00> : vector<16x40xf32>
    %48 = tpu.matmul %47, %39, %cst_52 {dimension_numbers = #tpu.dot_dimension_numbers<[1], [0], [0], [1], [0, 0, 1, 1], [], []>} : vector<16x20xf32>, vector<20x40xf32>, vector<16x40xf32> -> vector<16x40xf32>
    %c1_53 = arith.constant 1 : index
    %c0_54 = arith.constant 0 : index
    %c0_55 = arith.constant 0 : index
    %49 = vector.load %arg7[%c1_53, %c0_54, %c0_55] : memref<3x40x64xf32, #tpu.memory_space<vmem>>, vector<1x40x64xf32>
    %50 = vector.shape_cast %49 : vector<1x40x64xf32> to vector<40x64xf32>
    %cst_56 = arith.constant dense<0.000000e+00> : vector<16x64xf32>
    %51 = tpu.matmul %48, %50, %cst_56 {dimension_numbers = #tpu.dot_dimension_numbers<[1], [0], [0], [1], [0, 0, 1, 1], [], []>} : vector<16x40xf32>, vector<40x64xf32>, vector<16x64xf32> -> vector<16x64xf32>
    %52 = arith.addf %45, %51 : vector<16x64xf32>
    %c2_57 = arith.constant 2 : index
    %c0_58 = arith.constant 0 : index
    %c0_59 = arith.constant 0 : index
    %53 = vector.load %arg6[%c2_57, %c0_58, %c0_59] : memref<3x16x20xf32, #tpu.memory_space<vmem>>, vector<1x16x20xf32>
    %54 = vector.shape_cast %53 : vector<1x16x20xf32> to vector<16x20xf32>
    %cst_60 = arith.constant dense<0.000000e+00> : vector<16x40xf32>
    %55 = tpu.matmul %54, %39, %cst_60 {dimension_numbers = #tpu.dot_dimension_numbers<[1], [0], [0], [1], [0, 0, 1, 1], [], []>} : vector<16x20xf32>, vector<20x40xf32>, vector<16x40xf32> -> vector<16x40xf32>
    %c2_61 = arith.constant 2 : index
    %c0_62 = arith.constant 0 : index
    %c0_63 = arith.constant 0 : index
    %56 = vector.load %arg7[%c2_61, %c0_62, %c0_63] : memref<3x40x64xf32, #tpu.memory_space<vmem>>, vector<1x40x64xf32>
    %57 = vector.shape_cast %56 : vector<1x40x64xf32> to vector<40x64xf32>
    %cst_64 = arith.constant dense<0.000000e+00> : vector<16x64xf32>
    %58 = tpu.matmul %55, %57, %cst_64 {dimension_numbers = #tpu.dot_dimension_numbers<[1], [0], [0], [1], [0, 0, 1, 1], [], []>} : vector<16x40xf32>, vector<40x64xf32>, vector<16x64xf32> -> vector<16x64xf32>
    %59 = arith.addf %52, %58 : vector<16x64xf32>
    %c0_65 = arith.constant 0 : index
    %c0_66 = arith.constant 0 : index
    %60 = vector.load %arg8[%c0_65, %c0_66] : memref<1x64xf32, #tpu.memory_space<vmem>>, vector<1x64xf32>
    %61 = vector.broadcast %60 : vector<1x64xf32> to vector<16x64xf32>
    %62 = arith.addf %59, %61 : vector<16x64xf32>
    %cst_67 = arith.constant 0.000000e+00 : f32
    %63 = vector.broadcast %cst_67 : f32 to vector<16x64xf32>
    %64 = arith.maximumf %62, %63 : vector<16x64xf32>
    %c0_68 = arith.constant 0 : index
    %c0_69 = arith.constant 0 : index
    %c0_70 = arith.constant 0 : index
    %65 = vector.load %arg9[%c0_68, %c0_69, %c0_70] : memref<2x8x16xf32, #tpu.memory_space<vmem>>, vector<1x8x16xf32>
    %66 = vector.shape_cast %65 : vector<1x8x16xf32> to vector<8x16xf32>
    %cst_71 = arith.constant dense<0.000000e+00> : vector<8x64xf32>
    %67 = tpu.matmul %66, %64, %cst_71 {dimension_numbers = #tpu.dot_dimension_numbers<[1], [0], [0], [1], [0, 0, 1, 1], [], []>} : vector<8x16xf32>, vector<16x64xf32>, vector<8x64xf32> -> vector<8x64xf32>
    %c1_72 = arith.constant 1 : index
    %c0_73 = arith.constant 0 : index
    %c0_74 = arith.constant 0 : index
    %68 = vector.load %arg9[%c1_72, %c0_73, %c0_74] : memref<2x8x16xf32, #tpu.memory_space<vmem>>, vector<1x8x16xf32>
    %69 = vector.shape_cast %68 : vector<1x8x16xf32> to vector<8x16xf32>
    %cst_75 = arith.constant dense<0.000000e+00> : vector<8x64xf32>
    %70 = tpu.matmul %69, %64, %cst_75 {dimension_numbers = #tpu.dot_dimension_numbers<[1], [0], [0], [1], [0, 0, 1, 1], [], []>} : vector<8x16xf32>, vector<16x64xf32>, vector<8x64xf32> -> vector<8x64xf32>
    %71 = arith.maximumf %67, %70 : vector<8x64xf32>
    %c0_76 = arith.constant 0 : index
    %c0_77 = arith.constant 0 : index
    %c0_78 = arith.constant 0 : index
    %72 = vector.load %arg10[%c0_76, %c0_77, %c0_78] : memref<2x64x32xf32, #tpu.memory_space<vmem>>, vector<1x64x32xf32>
    %73 = vector.shape_cast %72 : vector<1x64x32xf32> to vector<64x32xf32>
    %cst_79 = arith.constant dense<0.000000e+00> : vector<8x32xf32>
    %74 = tpu.matmul %71, %73, %cst_79 {dimension_numbers = #tpu.dot_dimension_numbers<[1], [0], [0], [1], [0, 0, 1, 1], [], []>} : vector<8x64xf32>, vector<64x32xf32>, vector<8x32xf32> -> vector<8x32xf32>
    %c1_80 = arith.constant 1 : index
    %c0_81 = arith.constant 0 : index
    %c0_82 = arith.constant 0 : index
    %75 = vector.load %arg10[%c1_80, %c0_81, %c0_82] : memref<2x64x32xf32, #tpu.memory_space<vmem>>, vector<1x64x32xf32>
    %76 = vector.shape_cast %75 : vector<1x64x32xf32> to vector<64x32xf32>
    %cst_83 = arith.constant dense<0.000000e+00> : vector<8x32xf32>
    %77 = tpu.matmul %71, %76, %cst_83 {dimension_numbers = #tpu.dot_dimension_numbers<[1], [0], [0], [1], [0, 0, 1, 1], [], []>} : vector<8x64xf32>, vector<64x32xf32>, vector<8x32xf32> -> vector<8x32xf32>
    %78 = arith.maximumf %74, %77 : vector<8x32xf32>
    %c0_84 = arith.constant 0 : index
    %c0_85 = arith.constant 0 : index
    %79 = vector.load %arg12[%c0_84, %c0_85] : memref<1x32xf32, #tpu.memory_space<vmem>>, vector<1x32xf32>
    %80 = vector.extract_strided_slice %78 {offsets = [0, 0], sizes = [2, 32], strides = [1, 1]} : vector<8x32xf32> to vector<2x32xf32>
    %c0_86 = arith.constant 0 : index
    %c0_87 = arith.constant 0 : index
    %c0_88 = arith.constant 0 : index
    %81 = vector.load %arg11[%c0_86, %c0_87, %c0_88] : memref<4x32x32xf32, #tpu.memory_space<vmem>>, vector<1x32x32xf32>
    %82 = vector.shape_cast %81 : vector<1x32x32xf32> to vector<32x32xf32>
    %cst_89 = arith.constant dense<0.000000e+00> : vector<2x32xf32>
    %83 = tpu.matmul %80, %82, %cst_89 {dimension_numbers = #tpu.dot_dimension_numbers<[1], [0], [0], [1], [0, 0, 1, 1], [], []>} : vector<2x32xf32>, vector<32x32xf32>, vector<2x32xf32> -> vector<2x32xf32>
    %84 = vector.broadcast %79 : vector<1x32xf32> to vector<2x32xf32>
    %85 = arith.addf %84, %83 : vector<2x32xf32>
    %86 = vector.extract_strided_slice %78 {offsets = [2, 0], sizes = [2, 32], strides = [1, 1]} : vector<8x32xf32> to vector<2x32xf32>
    %c1_90 = arith.constant 1 : index
    %c0_91 = arith.constant 0 : index
    %c0_92 = arith.constant 0 : index
    %87 = vector.load %arg11[%c1_90, %c0_91, %c0_92] : memref<4x32x32xf32, #tpu.memory_space<vmem>>, vector<1x32x32xf32>
    %88 = vector.shape_cast %87 : vector<1x32x32xf32> to vector<32x32xf32>
    %cst_93 = arith.constant dense<0.000000e+00> : vector<2x32xf32>
    %89 = tpu.matmul %86, %88, %cst_93 {dimension_numbers = #tpu.dot_dimension_numbers<[1], [0], [0], [1], [0, 0, 1, 1], [], []>} : vector<2x32xf32>, vector<32x32xf32>, vector<2x32xf32> -> vector<2x32xf32>
    %90 = arith.addf %85, %89 : vector<2x32xf32>
    %91 = vector.extract_strided_slice %78 {offsets = [4, 0], sizes = [2, 32], strides = [1, 1]} : vector<8x32xf32> to vector<2x32xf32>
    %c2_94 = arith.constant 2 : index
    %c0_95 = arith.constant 0 : index
    %c0_96 = arith.constant 0 : index
    %92 = vector.load %arg11[%c2_94, %c0_95, %c0_96] : memref<4x32x32xf32, #tpu.memory_space<vmem>>, vector<1x32x32xf32>
    %93 = vector.shape_cast %92 : vector<1x32x32xf32> to vector<32x32xf32>
    %cst_97 = arith.constant dense<0.000000e+00> : vector<2x32xf32>
    %94 = tpu.matmul %91, %93, %cst_97 {dimension_numbers = #tpu.dot_dimension_numbers<[1], [0], [0], [1], [0, 0, 1, 1], [], []>} : vector<2x32xf32>, vector<32x32xf32>, vector<2x32xf32> -> vector<2x32xf32>
    %95 = arith.addf %90, %94 : vector<2x32xf32>
    %96 = vector.extract_strided_slice %78 {offsets = [6, 0], sizes = [2, 32], strides = [1, 1]} : vector<8x32xf32> to vector<2x32xf32>
    %c3 = arith.constant 3 : index
    %c0_98 = arith.constant 0 : index
    %c0_99 = arith.constant 0 : index
    %97 = vector.load %arg11[%c3, %c0_98, %c0_99] : memref<4x32x32xf32, #tpu.memory_space<vmem>>, vector<1x32x32xf32>
    %98 = vector.shape_cast %97 : vector<1x32x32xf32> to vector<32x32xf32>
    %cst_100 = arith.constant dense<0.000000e+00> : vector<2x32xf32>
    %99 = tpu.matmul %96, %98, %cst_100 {dimension_numbers = #tpu.dot_dimension_numbers<[1], [0], [0], [1], [0, 0, 1, 1], [], []>} : vector<2x32xf32>, vector<32x32xf32>, vector<2x32xf32> -> vector<2x32xf32>
    %100 = arith.addf %95, %99 : vector<2x32xf32>
    %cst_101 = arith.constant 0.000000e+00 : f32
    %101 = vector.broadcast %cst_101 : f32 to vector<2x32xf32>
    %102 = arith.maximumf %100, %101 : vector<2x32xf32>
    %c0_102 = arith.constant 0 : index
    %c0_103 = arith.constant 0 : index
    %103 = vector.load %arg13[%c0_102, %c0_103] : memref<32x32xf32, #tpu.memory_space<vmem>>, vector<32x32xf32>
    %cst_104 = arith.constant dense<0.000000e+00> : vector<2x32xf32>
    %104 = tpu.matmul %102, %103, %cst_104 {dimension_numbers = #tpu.dot_dimension_numbers<[1], [0], [0], [1], [0, 0, 1, 1], [], []>} : vector<2x32xf32>, vector<32x32xf32>, vector<2x32xf32> -> vector<2x32xf32>
    %c0_105 = arith.constant 0 : index
    %c0_106 = arith.constant 0 : index
    %105 = vector.load %arg14[%c0_105, %c0_106] : memref<1x32xf32, #tpu.memory_space<vmem>>, vector<1x32xf32>
    %106 = vector.broadcast %105 : vector<1x32xf32> to vector<2x32xf32>
    %107 = arith.addf %104, %106 : vector<2x32xf32>
    %cst_107 = arith.constant 0.000000e+00 : f32
    %108 = vector.broadcast %cst_107 : f32 to vector<2x32xf32>
    %109 = arith.maximumf %107, %108 : vector<2x32xf32>
    %c0_108 = arith.constant 0 : index
    %c0_109 = arith.constant 0 : index
    %110 = vector.load %arg15[%c0_108, %c0_109] : memref<32x10xf32, #tpu.memory_space<vmem>>, vector<32x10xf32>
    %cst_110 = arith.constant dense<0.000000e+00> : vector<2x10xf32>
    %111 = tpu.matmul %109, %110, %cst_110 {dimension_numbers = #tpu.dot_dimension_numbers<[1], [0], [0], [1], [0, 0, 1, 1], [], []>} : vector<2x32xf32>, vector<32x10xf32>, vector<2x10xf32> -> vector<2x10xf32>
    %c0_111 = arith.constant 0 : index
    %c0_112 = arith.constant 0 : index
    %112 = vector.load %arg16[%c0_111, %c0_112] : memref<1x10xf32, #tpu.memory_space<vmem>>, vector<1x10xf32>
    %113 = vector.broadcast %112 : vector<1x10xf32> to vector<2x10xf32>
    %114 = arith.addf %111, %113 : vector<2x10xf32>
    %c0_113 = arith.constant 0 : index
    %c0_114 = arith.constant 0 : index
    %115 = vector.load %arg17[%c0_113, %c0_114] : memref<2x10xf32, #tpu.memory_space<vmem>>, vector<2x10xf32>
    tpu.vector_store %arg17[%c0_113, %c0_114], %114 {strides = array<i32>} : memref<2x10xf32, #tpu.memory_space<vmem>>, vector<2x10xf32>,
    return
  }
}

</mosaic_0001>

<llo_original>
// kernel: tile.13
$region0: #{tile.13}
  #allocation0 [shape = 's32[1]{0}', space=sflag, size = 0x4, scoped, tag = 'scoped memory for tile.13']
  %s0 = inlined_call_operand.vmem [shape: f32[4], index: 0, kind: input, shape index: {}]
  %s1 = inlined_call_operand.vmem [shape: f32[16,4], index: 1, kind: output, shape index: {}]
  // Predicated region
  $region2: #{tile.13} parent=0 // pred_check
    _
  $region3: #{tile.13} parent=0 // pred_check_branch
    %3 = sbr.rel (0) target = $region5
  $region4: #{tile.13} parent=0 // pred_region
    _
  $region5: #{tile.13} parent=0 // pred_fallthru
    _
  %v4 = vld [vmem:[%s0] ss:$0 sm:$0xff]
  %5 = vst [vmem:[%s1] sm:$0xff] %v4
  %s6 = scalar_lea.vmem %s1, 8
  %7 = vst [vmem:[%s6] sm:$0xff] %v4

// kernel: tile.14
$region0: #{tile.14}
  %s0 = inlined_call_operand.vmem [shape: f32[16,4], index: 0, kind: input, shape index: {}]
  %s1 = inlined_call_operand.vmem [shape: f32[1,64], index: 1, kind: output, shape index: {}]
  $region1: #{tile.14} parent=0
    #allocation0 [shape = 'u8[4096]{0}', space=vmem, size = 0x1000, scoped, tag = 'scoped mem for output reshape']
    %v2 = vld [vmem:[%s0] sm:$0x1]
    %vm3 = vcmask 31744
    %4 = vst.msk [vmem:[#allocation0] sm:$0x1] %vm3, %v2
    %s5 = scalar_lea.vmem %s0, 15
    %v6 = vld [vmem:[%s5] sm:$0x1]
    %7 = vrot.lane.b32.xlu0 %v6, 60
    %v8 = vpop.permute.xlu0 %7
    %vm9 = vcmask 523744
    %10 = vst.msk [vmem:[#allocation0] sm:$0x1] %vm9, %v8
    %s11 = scalar_lea.vmem %s0, 14
    %v12 = vld [vmem:[%s11] sm:$0x1]
    %13 = vrot.lane.b32.xlu0 %v12, 56
    %v14 = vpop.permute.xlu0 %13
    %vm15 = vcmask 490944
    %16 = vst.msk [vmem:[#allocation0] sm:$0x1] %vm15, %v14
    %s17 = scalar_lea.vmem %s0, 13
    %v18 = vld [vmem:[%s17] sm:$0x1]
    %19 = vrot.lane.b32.xlu0 %v18, 52
    %v20 = vpop.permute.xlu0 %19
    %vm21 = vcmask 458144
    %22 = vst.msk [vmem:[#allocation0] sm:$0x1] %vm21, %v20
    %s23 = scalar_lea.vmem %s0, 12
    %v24 = vld [vmem:[%s23] sm:$0x1]
    %25 = vrot.lane.b32.xlu0 %v24, 48
    %v26 = vpop.permute.xlu0 %25
    %vm27 = vcmask 425344
    %28 = vst.msk [vmem:[#allocation0] sm:$0x1] %vm27, %v26
    %s29 = scalar_lea.vmem %s0, 11
    %v30 = vld [vmem:[%s29] sm:$0x1]
    %31 = vrot.lane.b32.xlu0 %v30, 44
    %v32 = vpop.permute.xlu0 %31
    %vm33 = vcmask 392544
    %34 = vst.msk [vmem:[#allocation0] sm:$0x1] %vm33, %v32
    %s35 = scalar_lea.vmem %s0, 10
    %v36 = vld [vmem:[%s35] sm:$0x1]
    %37 = vrot.lane.b32.xlu0 %v36, 40
    %v38 = vpop.permute.xlu0 %37
    %vm39 = vcmask 359744
    %40 = vst.msk [vmem:[#allocation0] sm:$0x1] %vm39, %v38
    %s41 = scalar_lea.vmem %s0, 9
    %v42 = vld [vmem:[%s41] sm:$0x1]
    %43 = vrot.lane.b32.xlu0 %v42, 36
    %v44 = vpop.permute.xlu0 %43
    %vm45 = vcmask 326944
    %46 = vst.msk [vmem:[#allocation0] sm:$0x1] %vm45, %v44
    %s47 = scalar_lea.vmem %s0, 8
    %v48 = vld [vmem:[%s47] sm:$0x1]
    %49 = vrot.lane.b32.xlu0 %v48, 32
    %v50 = vpop.permute.xlu0 %49
    %vm51 = vcmask 294144
    %52 = vst.msk [vmem:[#allocation0] sm:$0x1] %vm51, %v50
    %s53 = scalar_lea.vmem %s0, 7
    %v54 = vld [vmem:[%s53] sm:$0x1]
    %55 = vrot.lane.b32.xlu0 %v54, 28
    %v56 = vpop.permute.xlu0 %55
    %vm57 = vcmask 261344
    %58 = vst.msk [vmem:[#allocation0] sm:$0x1] %vm57, %v56
    %s59 = scalar_lea.vmem %s0, 6
    %v60 = vld [vmem:[%s59] sm:$0x1]
    %61 = vrot.lane.b32.xlu0 %v60, 24
    %v62 = vpop.permute.xlu0 %61
    %vm63 = vcmask 228544
    %64 = vst.msk [vmem:[#allocation0] sm:$0x1] %vm63, %v62
    %s65 = scalar_lea.vmem %s0, 5
    %v66 = vld [vmem:[%s65] sm:$0x1]
    %67 = vrot.lane.b32.xlu0 %v66, 20
    %v68 = vpop.permute.xlu0 %67
    %vm69 = vcmask 195744
    %70 = vst.msk [vmem:[#allocation0] sm:$0x1] %vm69, %v68
    %s71 = scalar_lea.vmem %s0, 4
    %v72 = vld [vmem:[%s71] sm:$0x1]
    %73 = vrot.lane.b32.xlu0 %v72, 16
    %v74 = vpop.permute.xlu0 %73
    %vm75 = vcmask 162944
    %76 = vst.msk [vmem:[#allocation0] sm:$0x1] %vm75, %v74
    %s77 = scalar_lea.vmem %s0, 3
    %v78 = vld [vmem:[%s77] sm:$0x1]
    %79 = vrot.lane.b32.xlu0 %v78, 12
    %v80 = vpop.permute.xlu0 %79
    %vm81 = vcmask 130144
    %82 = vst.msk [vmem:[#allocation0] sm:$0x1] %vm81, %v80
    %s83 = scalar_lea.vmem %s0, 2
    %v84 = vld [vmem:[%s83] sm:$0x1]
    %85 = vrot.lane.b32.xlu0 %v84, 8
    %v86 = vpop.permute.xlu0 %85
    %vm87 = vcmask 97344
    %88 = vst.msk [vmem:[#allocation0] sm:$0x1] %vm87, %v86
    %s89 = scalar_lea.vmem %s0, 1
    %v90 = vld [vmem:[%s89] sm:$0x1]
    %91 = vrot.lane.b32.xlu0 %v90, 4
    %v92 = vpop.permute.xlu0 %91
    %vm93 = vcmask 64544
    %94 = vst.msk [vmem:[#allocation0] sm:$0x1] %vm93, %v92
    %s96 = sshllo.u32 0, 1
    %v98 = vld [vmem:[#allocation0] sm:%s96]
    %s99 = sshllo.u32 0, 1
    %100 = vst [vmem:[%s1] sm:%s99] %v98

// kernel: tile.18
$region0: #{tile.18}
  #allocation0 [shape = 's32[1]{0}', space=sflag, size = 0x4, scoped, tag = 'scoped memory for tile.18']
  %s0 = inlined_call_operand.vmem [shape: f32[8], index: 0, kind: input, shape index: {}]
  %s1 = inlined_call_operand.vmem [shape: f32[8,8], index: 1, kind: output, shape index: {}]
  // Predicated region
  $region2: #{tile.18} parent=0 // pred_check
    _
  $region3: #{tile.18} parent=0 // pred_check_branch
    %3 = sbr.rel (0) target = $region5
  $region4: #{tile.18} parent=0 // pred_region
    _
  $region5: #{tile.18} parent=0 // pred_fallthru
    _
  %v4 = vld [vmem:[%s0] ss:$0 sm:$0xff]
  %5 = vst [vmem:[%s1] sm:$0xff] %v4

// kernel: tile.19
$region0: #{tile.19}
  %s0 = inlined_call_operand.vmem [shape: f32[8,8], index: 0, kind: input, shape index: {}]
  %s1 = inlined_call_operand.vmem [shape: f32[1,64], index: 1, kind: output, shape index: {}]
  $region1: #{tile.19} parent=0
    #allocation0 [shape = 'u8[4096]{0}', space=vmem, size = 0x1000, scoped, tag = 'scoped mem for output reshape']
    %v2 = vld [vmem:[%s0] sm:$0x1]
    %vm3 = vcmask 64512
    %4 = vst.msk [vmem:[#allocation0] sm:$0x1] %vm3, %v2
    %s5 = scalar_lea.vmem %s0, 7
    %v6 = vld [vmem:[%s5] sm:$0x1]
    %7 = vrot.lane.b32.xlu0 %v6, 56
    %v8 = vpop.permute.xlu0 %7
    %vm9 = vcmask 523712
    %10 = vst.msk [vmem:[#allocation0] sm:$0x1] %vm9, %v8
    %s11 = scalar_lea.vmem %s0, 6
    %v12 = vld [vmem:[%s11] sm:$0x1]
    %13 = vrot.lane.b32.xlu0 %v12, 48
    %v14 = vpop.permute.xlu0 %13
    %vm15 = vcmask 458112
    %16 = vst.msk [vmem:[#allocation0] sm:$0x1] %vm15, %v14
    %s17 = scalar_lea.vmem %s0, 5
    %v18 = vld [vmem:[%s17] sm:$0x1]
    %19 = vrot.lane.b32.xlu0 %v18, 40
    %v20 = vpop.permute.xlu0 %19
    %vm21 = vcmask 392512
    %22 = vst.msk [vmem:[#allocation0] sm:$0x1] %vm21, %v20
    %s23 = scalar_lea.vmem %s0, 4
    %v24 = vld [vmem:[%s23] sm:$0x1]
    %25 = vrot.lane.b32.xlu0 %v24, 32
    %v26 = vpop.permute.xlu0 %25
    %vm27 = vcmask 326912
    %28 = vst.msk [vmem:[#allocation0] sm:$0x1] %vm27, %v26
    %s29 = scalar_lea.vmem %s0, 3
    %v30 = vld [vmem:[%s29] sm:$0x1]
    %31 = vrot.lane.b32.xlu0 %v30, 24
    %v32 = vpop.permute.xlu0 %31
    %vm33 = vcmask 261312
    %34 = vst.msk [vmem:[#allocation0] sm:$0x1] %vm33, %v32
    %s35 = scalar_lea.vmem %s0, 2
    %v36 = vld [vmem:[%s35] sm:$0x1]
    %37 = vrot.lane.b32.xlu0 %v36, 16
    %v38 = vpop.permute.xlu0 %37
    %vm39 = vcmask 195712
    %40 = vst.msk [vmem:[#allocation0] sm:$0x1] %vm39, %v38
    %s41 = scalar_lea.vmem %s0, 1
    %v42 = vld [vmem:[%s41] sm:$0x1]
    %43 = vrot.lane.b32.xlu0 %v42, 8
    %v44 = vpop.permute.xlu0 %43
    %vm45 = vcmask 130112
    %46 = vst.msk [vmem:[#allocation0] sm:$0x1] %vm45, %v44
    %s48 = sshllo.u32 0, 1
    %v50 = vld [vmem:[#allocation0] sm:%s48]
    %s51 = sshllo.u32 0, 1
    %52 = vst [vmem:[%s1] sm:%s51] %v50

// kernel: mnist_forward.1
$region0: #{mnist_forward.1}
  #allocation0 [shape = 'u32[]', space=smem, size = 0x4, offset = 0x4, fixed_abs, tag = 'smem constant byte address 0x4 - core index']
  #allocation1 [shape = 'u32[144,128]{1,0:T(1,128)}', space=vmem, size = 0x12000, scoped, tag = 'internal scratch']
  %s0 = inlined_call_operand.vmem [shape: f32[36,18], index: 0, kind: input, shape index: {}]
  %s1 = inlined_call_operand.vmem [shape: f32[3,32,36], index: 1, kind: input, shape index: {}]
  %s2 = inlined_call_operand.vmem [shape: f32[3,18,64], index: 2, kind: input, shape index: {}]
  %s3 = inlined_call_operand.vmem [shape: f32[1,64], index: 3, kind: input, shape index: {}]
  %s4 = inlined_call_operand.vmem [shape: f32[2,20,32], index: 4, kind: input, shape index: {}]
  %s5 = inlined_call_operand.vmem [shape: f32[2,64,40], index: 5, kind: input, shape index: {}]
  %s6 = inlined_call_operand.vmem [shape: f32[3,16,20], index: 6, kind: input, shape index: {}]
  %s7 = inlined_call_operand.vmem [shape: f32[3,40,64], index: 7, kind: input, shape index: {}]
  %s8 = inlined_call_operand.vmem [shape: f32[1,64], index: 8, kind: input, shape index: {}]
  %s9 = inlined_call_operand.vmem [shape: f32[2,8,16], index: 9, kind: input, shape index: {}]
  %s10 = inlined_call_operand.vmem [shape: f32[2,64,32], index: 10, kind: input, shape index: {}]
  %s11 = inlined_call_operand.vmem [shape: f32[4,32,32], index: 11, kind: input, shape index: {}]
  %s12 = inlined_call_operand.vmem [shape: f32[1,32], index: 12, kind: input, shape index: {}]
  %s13 = inlined_call_operand.vmem [shape: f32[32,32], index: 13, kind: input, shape index: {}]
  %s14 = inlined_call_operand.vmem [shape: f32[1,32], index: 14, kind: input, shape index: {}]
  %s15 = inlined_call_operand.vmem [shape: f32[32,10], index: 15, kind: input, shape index: {}]
  %s16 = inlined_call_operand.vmem [shape: f32[1,10], index: 16, kind: input, shape index: {}]
  %s17 = inlined_call_operand.hbm [shape: f32[2,10], index: 17, kind: output, shape index: {}]
  %s18 = sld [smem:[#allocation0]]
  $region78: #{mnist_forward.1} parent=0
    _
  %s20 = ssub.s32 1, %s18
  %s21 = scalar_select 0, %s20, %s18
  $region1: #{mnist_forward.1} parent=0
    #allocation2 [shape = 'u8[1024]{0}', space=vmem, size = 0x400, scoped, tag = 'output window, operand 0, single buffered']
    #allocation3 [shape = 's32[1]{0}', space=sflag, size = 0x4, scoped, tag = 'scoped memory for mnist_forward.1']
    %22 = vsyncpa [#allocation3], 0
    // Predicated region
    $region2: #{mnist_forward.1} parent=1 // pred_check
      _
    $region3: #{mnist_forward.1} parent=1 // pred_check_branch
      %24 = sbr.rel (0) target = $region5
    $region4: #{mnist_forward.1} parent=1 // pred_region
      _
    $region5: #{mnist_forward.1} parent=1 // pred_fallthru
      _
    // Predicated region
    $region6: #{mnist_forward.1} parent=1 // pred_check
      _
    $region7: #{mnist_forward.1} parent=1 // pred_check_branch
      %26 = sbr.rel (0) target = $region9
    $region8: #{mnist_forward.1} parent=1 // pred_region
      _
    $region9: #{mnist_forward.1} parent=1 // pred_fallthru
      _
    // Predicated region
    $region10: #{mnist_forward.1} parent=1 // pred_check
      _
    $region11: #{mnist_forward.1} parent=1 // pred_check_branch
      %28 = sbr.rel (0) target = $region13
    $region12: #{mnist_forward.1} parent=1 // pred_region
      _
    $region13: #{mnist_forward.1} parent=1 // pred_fallthru
      _
    // Predicated region
    $region14: #{mnist_forward.1} parent=1 // pred_check
      _
    $region15: #{mnist_forward.1} parent=1 // pred_check_branch
      %30 = sbr.rel (0) target = $region17
    $region16: #{mnist_forward.1} parent=1 // pred_region
      _
    $region17: #{mnist_forward.1} parent=1 // pred_fallthru
      _
    // Predicated region
    $region18: #{mnist_forward.1} parent=1 // pred_check
      _
    $region19: #{mnist_forward.1} parent=1 // pred_check_branch
      %32 = sbr.rel (0) target = $region21
    $region20: #{mnist_forward.1} parent=1 // pred_region
      _
    $region21: #{mnist_forward.1} parent=1 // pred_fallthru
      _
    // Predicated region
    $region22: #{mnist_forward.1} parent=1 // pred_check
      _
    $region23: #{mnist_forward.1} parent=1 // pred_check_branch
      %34 = sbr.rel (0) target = $region25
    $region24: #{mnist_forward.1} parent=1 // pred_region
      _
    $region25: #{mnist_forward.1} parent=1 // pred_fallthru
      _
    // Predicated region
    $region26: #{mnist_forward.1} parent=1 // pred_check
      _
    $region27: #{mnist_forward.1} parent=1 // pred_check_branch
      %36 = sbr.rel (0) target = $region29
    $region28: #{mnist_forward.1} parent=1 // pred_region
      _
    $region29: #{mnist_forward.1} parent=1 // pred_fallthru
      _
    // Predicated region
    $region30: #{mnist_forward.1} parent=1 // pred_check
      _
    $region31: #{mnist_forward.1} parent=1 // pred_check_branch
      %38 = sbr.rel (0) target = $region33
    $region32: #{mnist_forward.1} parent=1 // pred_region
      _
    $region33: #{mnist_forward.1} parent=1 // pred_fallthru
      _
    // Predicated region
    $region34: #{mnist_forward.1} parent=1 // pred_check
      _
    $region35: #{mnist_forward.1} parent=1 // pred_check_branch
      %40 = sbr.rel (0) target = $region37
    $region36: #{mnist_forward.1} parent=1 // pred_region
      _
    $region37: #{mnist_forward.1} parent=1 // pred_fallthru
      _
    // Predicated region
    $region38: #{mnist_forward.1} parent=1 // pred_check
      _
    $region39: #{mnist_forward.1} parent=1 // pred_check_branch
      %42 = sbr.rel (0) target = $region41
    $region40: #{mnist_forward.1} parent=1 // pred_region
      _
    $region41: #{mnist_forward.1} parent=1 // pred_fallthru
      _
    // Predicated region
    $region42: #{mnist_forward.1} parent=1 // pred_check
      _
    $region43: #{mnist_forward.1} parent=1 // pred_check_branch
      %44 = sbr.rel (0) target = $region45
    $region44: #{mnist_forward.1} parent=1 // pred_region
      _
    $region45: #{mnist_forward.1} parent=1 // pred_fallthru
      _
    // Predicated region
    $region46: #{mnist_forward.1} parent=1 // pred_check
      _
    $region47: #{mnist_forward.1} parent=1 // pred_check_branch
      %46 = sbr.rel (0) target = $region49
    $region48: #{mnist_forward.1} parent=1 // pred_region
      _
    $region49: #{mnist_forward.1} parent=1 // pred_fallthru
      _
    // Predicated region
    $region50: #{mnist_forward.1} parent=1 // pred_check
      _
    $region51: #{mnist_forward.1} parent=1 // pred_check_branch
      %48 = sbr.rel (0) target = $region53
    $region52: #{mnist_forward.1} parent=1 // pred_region
      _
    $region53: #{mnist_forward.1} parent=1 // pred_fallthru
      _
    // Predicated region
    $region54: #{mnist_forward.1} parent=1 // pred_check
      _
    $region55: #{mnist_forward.1} parent=1 // pred_check_branch
      %50 = sbr.rel (0) target = $region57
    $region56: #{mnist_forward.1} parent=1 // pred_region
      _
    $region57: #{mnist_forward.1} parent=1 // pred_fallthru
      _
    // Predicated region
    $region58: #{mnist_forward.1} parent=1 // pred_check
      _
    $region59: #{mnist_forward.1} parent=1 // pred_check_branch
      %52 = sbr.rel (0) target = $region61
    $region60: #{mnist_forward.1} parent=1 // pred_region
      _
    $region61: #{mnist_forward.1} parent=1 // pred_fallthru
      _
    // Predicated region
    $region62: #{mnist_forward.1} parent=1 // pred_check
      _
    $region63: #{mnist_forward.1} parent=1 // pred_check_branch
      %54 = sbr.rel (0) target = $region65
    $region64: #{mnist_forward.1} parent=1 // pred_region
      _
    $region65: #{mnist_forward.1} parent=1 // pred_fallthru
      _
    // Predicated region
    $region66: #{mnist_forward.1} parent=1 // pred_check
      _
    $region67: #{mnist_forward.1} parent=1 // pred_check_branch
      %56 = sbr.rel (0) target = $region69
    $region68: #{mnist_forward.1} parent=1 // pred_region
      _
    $region69: #{mnist_forward.1} parent=1 // pred_fallthru
      _
    %v57 = vld [vmem:[%s0] sm:$0xff]
    %v58 = vld [vmem:[%s0 + $0x8] sm:$0xff]
    %v59 = vld [vmem:[%s0 + $0x10] sm:$0xff]
    %v60 = vld [vmem:[%s0 + $0x18] sm:$0xff]
    %v61 = vld [vmem:[%s0 + $0x20] sm:$0xf]
    %v62 = vld [vmem:[%s1] sm:$0xff]
    %v63 = vld [vmem:[%s1 + $0x8] sm:$0xff]
    %v64 = vld [vmem:[%s1 + $0x10] sm:$0xff]
    %v65 = vld [vmem:[%s1 + $0x18] sm:$0xff]
    %vm66 = vcmask 293888
    %v68 = vsel %vm66, %v62, 0
    %v71 = vsel %vm66, %v63, 0
    %v74 = vsel %vm66, %v64, 0
    %v77 = vsel %vm66, %v65, 0
    %vm79 = vcmask 1043456
    %v81 = vsel %vm79, %v61, 0
    %83 = vmatprep.subr.mxu0 0.0
    %84 = vmatpush1.msra.mxu0 %v57
    %85 = vmatprep.subr.mxu0 0.0
    %86 = vmatpush1.msra.mxu0 %v58
    %87 = vmatprep.subr.mxu0 0.0
    %88 = vmatpush1.msra.mxu0 %v59
    %89 = vmatprep.subr.mxu0 0.0
    %90 = vmatpush1.msra.mxu0 %v60
    %91 = vmatprep.subr.mxu0 0.0
    %92 = vmatpush1.msra.mxu0 %v81
    %93 = vmatprep.subr.mxu0 0.0
    %94 = vmatpush1.msra.mxu0 0.0
    %95 = vmatprep.subr.mxu0 0.0
    %96 = vmatpush1.msra.mxu0 0.0
    %97 = vmatprep.subr.mxu0 0.0
    %98 = vmatpush1.msra.mxu0 0.0
    %99 = vmatprep.subr.mxu0 0.0
    %100 = vmatpush1.msra.mxu0 0.0
    %101 = vmatprep.subr.mxu0 0.0
    %102 = vmatpush1.msra.mxu0 0.0
    %103 = vmatprep.subr.mxu0 0.0
    %104 = vmatpush1.msra.mxu0 0.0
    %105 = vmatprep.subr.mxu0 0.0
    %106 = vmatpush1.msra.mxu0 0.0
    %107 = vmatprep.subr.mxu0 0.0
    %108 = vmatpush1.msra.mxu0 0.0
    %109 = vmatprep.subr.mxu0 0.0
    %110 = vmatpush1.msra.mxu0 0.0
    %111 = vmatprep.subr.mxu0 0.0
    %112 = vmatpush1.msra.mxu0 0.0
    %113 = vmatprep.subr.mxu0 0.0
    %114 = vmatpush1.msra.mxu0 0.0
    %115 = vmatprep.subr.mxu0 0.0
    %116 = vmatpush1.msra.mxu0 0.0
    %117 = vmatprep.subr.mxu0 0.0
    %118 = vmatpush1.msra.mxu0 0.0
    %119 = vmatprep.subr.mxu0 0.0
    %120 = vmatpush1.msra.mxu0 0.0
    %121 = vmatprep.subr.mxu0 0.0
    %122 = vmatpush1.msra.mxu0 0.0
    %123 = vmatprep.subr.mxu0 0.0
    %124 = vmatpush1.msra.mxu0 0.0
    %125 = vmatprep.subr.mxu0 0.0
    %126 = vmatpush1.msra.mxu0 0.0
    %127 = vmatprep.subr.mxu0 0.0
    %128 = vmatpush1.msra.mxu0 0.0
    %129 = vmatprep.subr.mxu0 0.0
    %130 = vmatpush1.msra.mxu0 0.0
    %131 = vmatprep.subr.mxu0 0.0
    %132 = vmatpush1.msra.mxu0 0.0
    %133 = vmatprep.subr.mxu0 0.0
    %134 = vmatpush1.msra.mxu0 0.0
    %135 = vmatprep.subr.mxu0 0.0
    %136 = vmatpush1.msra.mxu0 0.0
    %137 = vmatprep.subr.mxu0 0.0
    %138 = vmatpush1.msra.mxu0 0.0
    %139 = vmatprep.subr.mxu0 0.0
    %140 = vmatpush1.msra.mxu0 0.0
    %141 = vmatprep.subr.mxu0 0.0
    %142 = vmatpush1.msra.mxu0 0.0
    %143 = vmatprep.subr.mxu0 0.0
    %144 = vmatpush1.msra.mxu0 0.0
    %145 = vmatprep.subr.mxu0 0.0
    %146 = vmatpush1.msra.mxu0 0.0
    %147 = vmatprep.mubr.f32.mxu0 0.0
    %148 = vmatmul.mubr.f32.gmra.mrb[0].mxu0 %v68
    %v149 = vpop.f32.mrb[0].mxu0
    %v150 = vadd.f32 0.0, %v149
    %v151 = vpop.f32.mrb[0].mxu0
    %152 = vmatprep.mubr.f32.mxu0 0.0
    %153 = vmatmul.mubr.f32.gmra.mrb[0].mxu0 %v71
    %v154 = vpop.f32.mrb[0].mxu0
    %v155 = vadd.f32 0.0, %v154
    %v156 = vpop.f32.mrb[0].mxu0
    %157 = vmatprep.mubr.f32.mxu0 0.0
    %158 = vmatmul.mubr.f32.gmra.mrb[0].mxu0 %v74
    %v159 = vpop.f32.mrb[0].mxu0
    %v160 = vadd.f32 0.0, %v159
    %v161 = vpop.f32.mrb[0].mxu0
    %162 = vmatprep.mubr.f32.mxu0 0.0
    %163 = vmatmul.mubr.f32.gmra.mrb[0].mxu0 %v77
    %v164 = vpop.f32.mrb[0].mxu0
    %v165 = vadd.f32 0.0, %v164
    %v166 = vpop.f32.mrb[0].mxu0
    %167 = vdwg.mxu0
    %v168 = vld [vmem:[%s2] sm:$0xff]
    %v169 = vld [vmem:[%s2 + $0x8] sm:$0xff]
    %v170 = vld [vmem:[%s2 + $0x10] sm:$0x3]
    %s171 = scalar_lea.vmem %s1, 32
    %v172 = vld [vmem:[%s171] sm:$0xff]
    %v173 = vld [vmem:[%s171 + $0x8] sm:$0xff]
    %v174 = vld [vmem:[%s171 + $0x10] sm:$0xff]
    %v175 = vld [vmem:[%s171 + $0x18] sm:$0xff]
    %v177 = vsel %vm66, %v172, 0
    %v180 = vsel %vm66, %v173, 0
    %v183 = vsel %vm66, %v174, 0
    %v186 = vsel %vm66, %v175, 0
    %188 = vmatprep.subr.mxu0 0.0
    %189 = vmatpush1.msra.mxu0 %v57
    %190 = vmatprep.subr.mxu0 0.0
    %191 = vmatpush1.msra.mxu0 %v58
    %192 = vmatprep.subr.mxu0 0.0
    %193 = vmatpush1.msra.mxu0 %v59
    %194 = vmatprep.subr.mxu0 0.0
    %195 = vmatpush1.msra.mxu0 %v60
    %196 = vmatprep.subr.mxu0 0.0
    %197 = vmatpush1.msra.mxu0 %v81
    %198 = vmatprep.subr.mxu0 0.0
    %199 = vmatpush1.msra.mxu0 0.0
    %200 = vmatprep.subr.mxu0 0.0
    %201 = vmatpush1.msra.mxu0 0.0
    %202 = vmatprep.subr.mxu0 0.0
    %203 = vmatpush1.msra.mxu0 0.0
    %204 = vmatprep.subr.mxu0 0.0
    %205 = vmatpush1.msra.mxu0 0.0
    %206 = vmatprep.subr.mxu0 0.0
    %207 = vmatpush1.msra.mxu0 0.0
    %208 = vmatprep.subr.mxu0 0.0
    %209 = vmatpush1.msra.mxu0 0.0
    %210 = vmatprep.subr.mxu0 0.0
    %211 = vmatpush1.msra.mxu0 0.0
    %212 = vmatprep.subr.mxu0 0.0
    %213 = vmatpush1.msra.mxu0 0.0
    %214 = vmatprep.subr.mxu0 0.0
    %215 = vmatpush1.msra.mxu0 0.0
    %216 = vmatprep.subr.mxu0 0.0
    %217 = vmatpush1.msra.mxu0 0.0
    %218 = vmatprep.subr.mxu0 0.0
    %219 = vmatpush1.msra.mxu0 0.0
    %220 = vmatprep.subr.mxu0 0.0
    %221 = vmatpush1.msra.mxu0 0.0
    %222 = vmatprep.subr.mxu0 0.0
    %223 = vmatpush1.msra.mxu0 0.0
    %224 = vmatprep.subr.mxu0 0.0
    %225 = vmatpush1.msra.mxu0 0.0
    %226 = vmatprep.subr.mxu0 0.0
    %227 = vmatpush1.msra.mxu0 0.0
    %228 = vmatprep.subr.mxu0 0.0
    %229 = vmatpush1.msra.mxu0 0.0
    %230 = vmatprep.subr.mxu0 0.0
    %231 = vmatpush1.msra.mxu0 0.0
    %232 = vmatprep.subr.mxu0 0.0
    %233 = vmatpush1.msra.mxu0 0.0
    %234 = vmatprep.subr.mxu0 0.0
    %235 = vmatpush1.msra.mxu0 0.0
    %236 = vmatprep.subr.mxu0 0.0
    %237 = vmatpush1.msra.mxu0 0.0
    %238 = vmatprep.subr.mxu0 0.0
    %239 = vmatpush1.msra.mxu0 0.0
    %240 = vmatprep.subr.mxu0 0.0
    %241 = vmatpush1.msra.mxu0 0.0
    %242 = vmatprep.subr.mxu0 0.0
    %243 = vmatpush1.msra.mxu0 0.0
    %244 = vmatprep.subr.mxu0 0.0
    %245 = vmatpush1.msra.mxu0 0.0
    %246 = vmatprep.subr.mxu0 0.0
    %247 = vmatpush1.msra.mxu0 0.0
    %248 = vmatprep.subr.mxu0 0.0
    %249 = vmatpush1.msra.mxu0 0.0
    %250 = vmatprep.subr.mxu0 0.0
    %251 = vmatpush1.msra.mxu0 0.0
    %252 = vmatprep.mubr.f32.mxu0 0.0
    %253 = vmatmul.mubr.f32.gmra.mrb[0].mxu0 %v177
    %v254 = vpop.f32.mrb[0].mxu0
    %v255 = vadd.f32 0.0, %v254
    %v256 = vpop.f32.mrb[0].mxu0
    %257 = vmatprep.mubr.f32.mxu0 0.0
    %258 = vmatmul.mubr.f32.gmra.mrb[0].mxu0 %v180
    %v259 = vpop.f32.mrb[0].mxu0
    %v260 = vadd.f32 0.0, %v259
    %v261 = vpop.f32.mrb[0].mxu0
    %262 = vmatprep.mubr.f32.mxu0 0.0
    %263 = vmatmul.mubr.f32.gmra.mrb[0].mxu0 %v183
    %v264 = vpop.f32.mrb[0].mxu0
    %v265 = vadd.f32 0.0, %v264
    %v266 = vpop.f32.mrb[0].mxu0
    %267 = vmatprep.mubr.f32.mxu0 0.0
    %268 = vmatmul.mubr.f32.gmra.mrb[0].mxu0 %v186
    %v269 = vpop.f32.mrb[0].mxu0
    %v270 = vadd.f32 0.0, %v269
    %v271 = vpop.f32.mrb[0].mxu0
    %272 = vdwg.mxu0
    %s273 = scalar_lea.vmem %s2, 24
    %v274 = vld [vmem:[%s273] sm:$0xff]
    %v275 = vld [vmem:[%s273 + $0x8] sm:$0xff]
    %v276 = vld [vmem:[%s273 + $0x10] sm:$0x3]
    %vm277 = vcmask 146432
    %v279 = vsel %vm277, %v255, 0
    %v282 = vsel %vm277, %v260, 0
    %v285 = vsel %vm277, %v265, 0
    %v288 = vsel %vm277, %v270, 0
    %vm290 = vcmask 1041408
    %v292 = vsel %vm290, %v276, 0
    %294 = vmatprep.subr.mxu0 0.0
    %295 = vmatpush1.msra.mxu0 %v274
    %296 = vmatprep.subr.mxu0 0.0
    %297 = vmatpush1.msra.mxu0 %v275
    %298 = vmatprep.subr.mxu0 0.0
    %299 = vmatpush1.msra.mxu0 %v292
    %300 = vmatprep.subr.mxu0 0.0
    %301 = vmatpush1.msra.mxu0 0.0
    %302 = vmatprep.subr.mxu0 0.0
    %303 = vmatpush1.msra.mxu0 0.0
    %304 = vmatprep.subr.mxu0 0.0
    %305 = vmatpush1.msra.mxu0 0.0
    %306 = vmatprep.subr.mxu0 0.0
    %307 = vmatpush1.msra.mxu0 0.0
    %308 = vmatprep.subr.mxu0 0.0
    %309 = vmatpush1.msra.mxu0 0.0
    %310 = vmatprep.subr.mxu0 0.0
    %311 = vmatpush1.msra.mxu0 0.0
    %312 = vmatprep.subr.mxu0 0.0
    %313 = vmatpush1.msra.mxu0 0.0
    %314 = vmatprep.subr.mxu0 0.0
    %315 = vmatpush1.msra.mxu0 0.0
    %316 = vmatprep.subr.mxu0 0.0
    %317 = vmatpush1.msra.mxu0 0.0
    %318 = vmatprep.subr.mxu0 0.0
    %319 = vmatpush1.msra.mxu0 0.0
    %320 = vmatprep.subr.mxu0 0.0
    %321 = vmatpush1.msra.mxu0 0.0
    %322 = vmatprep.subr.mxu0 0.0
    %323 = vmatpush1.msra.mxu0 0.0
    %324 = vmatprep.subr.mxu0 0.0
    %325 = vmatpush1.msra.mxu0 0.0
    %326 = vmatprep.subr.mxu0 0.0
    %327 = vmatpush1.msra.mxu0 0.0
    %328 = vmatprep.subr.mxu0 0.0
    %329 = vmatpush1.msra.mxu0 0.0
    %330 = vmatprep.subr.mxu0 0.0
    %331 = vmatpush1.msra.mxu0 0.0
    %332 = vmatprep.subr.mxu0 0.0
    %333 = vmatpush1.msra.mxu0 0.0
    %334 = vmatprep.subr.mxu0 0.0
    %335 = vmatpush1.msra.mxu0 0.0
    %336 = vmatprep.subr.mxu0 0.0
    %337 = vmatpush1.msra.mxu0 0.0
    %338 = vmatprep.subr.mxu0 0.0
    %339 = vmatpush1.msra.mxu0 0.0
    %340 = vmatprep.subr.mxu0 0.0
    %341 = vmatpush1.msra.mxu0 0.0
    %342 = vmatprep.subr.mxu0 0.0
    %343 = vmatpush1.msra.mxu0 0.0
    %344 = vmatprep.subr.mxu0 0.0
    %345 = vmatpush1.msra.mxu0 0.0
    %346 = vmatprep.subr.mxu0 0.0
    %347 = vmatpush1.msra.mxu0 0.0
    %348 = vmatprep.subr.mxu0 0.0
    %349 = vmatpush1.msra.mxu0 0.0
    %350 = vmatprep.subr.mxu0 0.0
    %351 = vmatpush1.msra.mxu0 0.0
    %352 = vmatprep.subr.mxu0 0.0
    %353 = vmatpush1.msra.mxu0 0.0
    %354 = vmatprep.subr.mxu0 0.0
    %355 = vmatpush1.msra.mxu0 0.0
    %356 = vmatprep.subr.mxu0 0.0
    %357 = vmatpush1.msra.mxu0 0.0
    %358 = vmatprep.mubr.f32.mxu0 0.0
    %359 = vmatmul.mubr.f32.gmra.mrb[0].mxu0 %v279
    %v360 = vpop.f32.mrb[0].mxu0
    %v361 = vadd.f32 0.0, %v360
    %v362 = vpop.f32.mrb[0].mxu0
    %363 = vmatprep.mubr.f32.mxu0 0.0
    %364 = vmatmul.mubr.f32.gmra.mrb[0].mxu0 %v282
    %v365 = vpop.f32.mrb[0].mxu0
    %v366 = vadd.f32 0.0, %v365
    %v367 = vpop.f32.mrb[0].mxu0
    %368 = vmatprep.mubr.f32.mxu0 0.0
    %369 = vmatmul.mubr.f32.gmra.mrb[0].mxu0 %v285
    %v370 = vpop.f32.mrb[0].mxu0
    %v371 = vadd.f32 0.0, %v370
    %v372 = vpop.f32.mrb[0].mxu0
    %373 = vmatprep.mubr.f32.mxu0 0.0
    %374 = vmatmul.mubr.f32.gmra.mrb[0].mxu0 %v288
    %v375 = vpop.f32.mrb[0].mxu0
    %v376 = vadd.f32 0.0, %v375
    %v377 = vpop.f32.mrb[0].mxu0
    %378 = vdwg.mxu0
    %v380 = vsel %vm277, %v150, 0
    %v383 = vsel %vm277, %v155, 0
    %v386 = vsel %vm277, %v160, 0
    %v389 = vsel %vm277, %v165, 0
    %v392 = vsel %vm290, %v170, 0
    %394 = vmatprep.subr.mxu0 0.0
    %395 = vmatpush1.msra.mxu0 %v168
    %396 = vmatprep.subr.mxu0 0.0
    %397 = vmatpush1.msra.mxu0 %v169
    %398 = vmatprep.subr.mxu0 0.0
    %399 = vmatpush1.msra.mxu0 %v392
    %400 = vmatprep.subr.mxu0 0.0
    %401 = vmatpush1.msra.mxu0 0.0
    %402 = vmatprep.subr.mxu0 0.0
    %403 = vmatpush1.msra.mxu0 0.0
    %404 = vmatprep.subr.mxu0 0.0
    %405 = vmatpush1.msra.mxu0 0.0
    %406 = vmatprep.subr.mxu0 0.0
    %407 = vmatpush1.msra.mxu0 0.0
    %408 = vmatprep.subr.mxu0 0.0
    %409 = vmatpush1.msra.mxu0 0.0
    %410 = vmatprep.subr.mxu0 0.0
    %411 = vmatpush1.msra.mxu0 0.0
    %412 = vmatprep.subr.mxu0 0.0
    %413 = vmatpush1.msra.mxu0 0.0
    %414 = vmatprep.subr.mxu0 0.0
    %415 = vmatpush1.msra.mxu0 0.0
    %416 = vmatprep.subr.mxu0 0.0
    %417 = vmatpush1.msra.mxu0 0.0
    %418 = vmatprep.subr.mxu0 0.0
    %419 = vmatpush1.msra.mxu0 0.0
    %420 = vmatprep.subr.mxu0 0.0
    %421 = vmatpush1.msra.mxu0 0.0
    %422 = vmatprep.subr.mxu0 0.0
    %423 = vmatpush1.msra.mxu0 0.0
    %424 = vmatprep.subr.mxu0 0.0
    %425 = vmatpush1.msra.mxu0 0.0
    %426 = vmatprep.subr.mxu0 0.0
    %427 = vmatpush1.msra.mxu0 0.0
    %428 = vmatprep.subr.mxu0 0.0
    %429 = vmatpush1.msra.mxu0 0.0
    %430 = vmatprep.subr.mxu0 0.0
    %431 = vmatpush1.msra.mxu0 0.0
    %432 = vmatprep.subr.mxu0 0.0
    %433 = vmatpush1.msra.mxu0 0.0
    %434 = vmatprep.subr.mxu0 0.0
    %435 = vmatpush1.msra.mxu0 0.0
    %436 = vmatprep.subr.mxu0 0.0
    %437 = vmatpush1.msra.mxu0 0.0
    %438 = vmatprep.subr.mxu0 0.0
    %439 = vmatpush1.msra.mxu0 0.0
    %440 = vmatprep.subr.mxu0 0.0
    %441 = vmatpush1.msra.mxu0 0.0
    %442 = vmatprep.subr.mxu0 0.0
    %443 = vmatpush1.msra.mxu0 0.0
    %444 = vmatprep.subr.mxu0 0.0
    %445 = vmatpush1.msra.mxu0 0.0
    %446 = vmatprep.subr.mxu0 0.0
    %447 = vmatpush1.msra.mxu0 0.0
    %448 = vmatprep.subr.mxu0 0.0
    %449 = vmatpush1.msra.mxu0 0.0
    %450 = vmatprep.subr.mxu0 0.0
    %451 = vmatpush1.msra.mxu0 0.0
    %452 = vmatprep.subr.mxu0 0.0
    %453 = vmatpush1.msra.mxu0 0.0
    %454 = vmatprep.subr.mxu0 0.0
    %455 = vmatpush1.msra.mxu0 0.0
    %456 = vmatprep.subr.mxu0 0.0
    %457 = vmatpush1.msra.mxu0 0.0
    %458 = vmatprep.mubr.f32.mxu0 0.0
    %459 = vmatmul.mubr.f32.gmra.mrb[0].mxu0 %v380
    %v460 = vpop.f32.mrb[0].mxu0
    %v461 = vadd.f32 %v361, %v460
    %v462 = vpop.f32.mrb[0].mxu0
    %463 = vmatprep.mubr.f32.mxu0 0.0
    %464 = vmatmul.mubr.f32.gmra.mrb[0].mxu0 %v383
    %v465 = vpop.f32.mrb[0].mxu0
    %v466 = vadd.f32 %v366, %v465
    %v467 = vpop.f32.mrb[0].mxu0
    %468 = vmatprep.mubr.f32.mxu0 0.0
    %469 = vmatmul.mubr.f32.gmra.mrb[0].mxu0 %v386
    %v470 = vpop.f32.mrb[0].mxu0
    %v471 = vadd.f32 %v371, %v470
    %v472 = vpop.f32.mrb[0].mxu0
    %473 = vmatprep.mubr.f32.mxu0 0.0
    %474 = vmatmul.mubr.f32.gmra.mrb[0].mxu0 %v389
    %v475 = vpop.f32.mrb[0].mxu0
    %v476 = vadd.f32 %v376, %v475
    %v477 = vpop.f32.mrb[0].mxu0
    %478 = vdwg.mxu0
    %s479 = scalar_lea.vmem %s1, 64
    %v480 = vld [vmem:[%s479] sm:$0xff]
    %v481 = vld [vmem:[%s479 + $0x8] sm:$0xff]
    %v482 = vld [vmem:[%s479 + $0x10] sm:$0xff]
    %v483 = vld [vmem:[%s479 + $0x18] sm:$0xff]
    %v485 = vsel %vm66, %v480, 0
    %v488 = vsel %vm66, %v481, 0
    %v491 = vsel %vm66, %v482, 0
    %v494 = vsel %vm66, %v483, 0
    %496 = vmatprep.subr.mxu0 0.0
    %497 = vmatpush1.msra.mxu0 %v57
    %498 = vmatprep.subr.mxu0 0.0
    %499 = vmatpush1.msra.mxu0 %v58
    %500 = vmatprep.subr.mxu0 0.0
    %501 = vmatpush1.msra.mxu0 %v59
    %502 = vmatprep.subr.mxu0 0.0
    %503 = vmatpush1.msra.mxu0 %v60
    %504 = vmatprep.subr.mxu0 0.0
    %505 = vmatpush1.msra.mxu0 %v81
    %506 = vmatprep.subr.mxu0 0.0
    %507 = vmatpush1.msra.mxu0 0.0
    %508 = vmatprep.subr.mxu0 0.0
    %509 = vmatpush1.msra.mxu0 0.0
    %510 = vmatprep.subr.mxu0 0.0
    %511 = vmatpush1.msra.mxu0 0.0
    %512 = vmatprep.subr.mxu0 0.0
    %513 = vmatpush1.msra.mxu0 0.0
    %514 = vmatprep.subr.mxu0 0.0
    %515 = vmatpush1.msra.mxu0 0.0
    %516 = vmatprep.subr.mxu0 0.0
    %517 = vmatpush1.msra.mxu0 0.0
    %518 = vmatprep.subr.mxu0 0.0
    %519 = vmatpush1.msra.mxu0 0.0
    %520 = vmatprep.subr.mxu0 0.0
    %521 = vmatpush1.msra.mxu0 0.0
    %522 = vmatprep.subr.mxu0 0.0
    %523 = vmatpush1.msra.mxu0 0.0
    %524 = vmatprep.subr.mxu0 0.0
    %525 = vmatpush1.msra.mxu0 0.0
    %526 = vmatprep.subr.mxu0 0.0
    %527 = vmatpush1.msra.mxu0 0.0
    %528 = vmatprep.subr.mxu0 0.0
    %529 = vmatpush1.msra.mxu0 0.0
    %530 = vmatprep.subr.mxu0 0.0
    %531 = vmatpush1.msra.mxu0 0.0
    %532 = vmatprep.subr.mxu0 0.0
    %533 = vmatpush1.msra.mxu0 0.0
    %534 = vmatprep.subr.mxu0 0.0
    %535 = vmatpush1.msra.mxu0 0.0
    %536 = vmatprep.subr.mxu0 0.0
    %537 = vmatpush1.msra.mxu0 0.0
    %538 = vmatprep.subr.mxu0 0.0
    %539 = vmatpush1.msra.mxu0 0.0
    %540 = vmatprep.subr.mxu0 0.0
    %541 = vmatpush1.msra.mxu0 0.0
    %542 = vmatprep.subr.mxu0 0.0
    %543 = vmatpush1.msra.mxu0 0.0
    %544 = vmatprep.subr.mxu0 0.0
    %545 = vmatpush1.msra.mxu0 0.0
    %546 = vmatprep.subr.mxu0 0.0
    %547 = vmatpush1.msra.mxu0 0.0
    %548 = vmatprep.subr.mxu0 0.0
    %549 = vmatpush1.msra.mxu0 0.0
    %550 = vmatprep.subr.mxu0 0.0
    %551 = vmatpush1.msra.mxu0 0.0
    %552 = vmatprep.subr.mxu0 0.0
    %553 = vmatpush1.msra.mxu0 0.0
    %554 = vmatprep.subr.mxu0 0.0
    %555 = vmatpush1.msra.mxu0 0.0
    %556 = vmatprep.subr.mxu0 0.0
    %557 = vmatpush1.msra.mxu0 0.0
    %558 = vmatprep.subr.mxu0 0.0
    %559 = vmatpush1.msra.mxu0 0.0
    %560 = vmatprep.mubr.f32.mxu0 0.0
    %561 = vmatmul.mubr.f32.gmra.mrb[0].mxu0 %v485
    %v562 = vpop.f32.mrb[0].mxu0
    %v563 = vadd.f32 0.0, %v562
    %v564 = vpop.f32.mrb[0].mxu0
    %565 = vmatprep.mubr.f32.mxu0 0.0
    %566 = vmatmul.mubr.f32.gmra.mrb[0].mxu0 %v488
    %v567 = vpop.f32.mrb[0].mxu0
    %v568 = vadd.f32 0.0, %v567
    %v569 = vpop.f32.mrb[0].mxu0
    %570 = vmatprep.mubr.f32.mxu0 0.0
    %571 = vmatmul.mubr.f32.gmra.mrb[0].mxu0 %v491
    %v572 = vpop.f32.mrb[0].mxu0
    %v573 = vadd.f32 0.0, %v572
    %v574 = vpop.f32.mrb[0].mxu0
    %575 = vmatprep.mubr.f32.mxu0 0.0
    %576 = vmatmul.mubr.f32.gmra.mrb[0].mxu0 %v494
    %v577 = vpop.f32.mrb[0].mxu0
    %v578 = vadd.f32 0.0, %v577
    %v579 = vpop.f32.mrb[0].mxu0
    %580 = vdwg.mxu0
    %s581 = scalar_lea.vmem %s2, 48
    %v582 = vld [vmem:[%s581] sm:$0xff]
    %v583 = vld [vmem:[%s581 + $0x8] sm:$0xff]
    %v584 = vld [vmem:[%s581 + $0x10] sm:$0x3]
    %v586 = vsel %vm277, %v563, 0
    %v589 = vsel %vm277, %v568, 0
    %v592 = vsel %vm277, %v573, 0
    %v595 = vsel %vm277, %v578, 0
    %v598 = vsel %vm290, %v584, 0
    %600 = vmatprep.subr.mxu0 0.0
    %601 = vmatpush1.msra.mxu0 %v582
    %602 = vmatprep.subr.mxu0 0.0
    %603 = vmatpush1.msra.mxu0 %v583
    %604 = vmatprep.subr.mxu0 0.0
    %605 = vmatpush1.msra.mxu0 %v598
    %606 = vmatprep.subr.mxu0 0.0
    %607 = vmatpush1.msra.mxu0 0.0
    %608 = vmatprep.subr.mxu0 0.0
    %609 = vmatpush1.msra.mxu0 0.0
    %610 = vmatprep.subr.mxu0 0.0
    %611 = vmatpush1.msra.mxu0 0.0
    %612 = vmatprep.subr.mxu0 0.0
    %613 = vmatpush1.msra.mxu0 0.0
    %614 = vmatprep.subr.mxu0 0.0
    %615 = vmatpush1.msra.mxu0 0.0
    %616 = vmatprep.subr.mxu0 0.0
    %617 = vmatpush1.msra.mxu0 0.0
    %618 = vmatprep.subr.mxu0 0.0
    %619 = vmatpush1.msra.mxu0 0.0
    %620 = vmatprep.subr.mxu0 0.0
    %621 = vmatpush1.msra.mxu0 0.0
    %622 = vmatprep.subr.mxu0 0.0
    %623 = vmatpush1.msra.mxu0 0.0
    %624 = vmatprep.subr.mxu0 0.0
    %625 = vmatpush1.msra.mxu0 0.0
    %626 = vmatprep.subr.mxu0 0.0
    %627 = vmatpush1.msra.mxu0 0.0
    %628 = vmatprep.subr.mxu0 0.0
    %629 = vmatpush1.msra.mxu0 0.0
    %630 = vmatprep.subr.mxu0 0.0
    %631 = vmatpush1.msra.mxu0 0.0
    %632 = vmatprep.subr.mxu0 0.0
    %633 = vmatpush1.msra.mxu0 0.0
    %634 = vmatprep.subr.mxu0 0.0
    %635 = vmatpush1.msra.mxu0 0.0
    %636 = vmatprep.subr.mxu0 0.0
    %637 = vmatpush1.msra.mxu0 0.0
    %638 = vmatprep.subr.mxu0 0.0
    %639 = vmatpush1.msra.mxu0 0.0
    %640 = vmatprep.subr.mxu0 0.0
    %641 = vmatpush1.msra.mxu0 0.0
    %642 = vmatprep.subr.mxu0 0.0
    %643 = vmatpush1.msra.mxu0 0.0
    %644 = vmatprep.subr.mxu0 0.0
    %645 = vmatpush1.msra.mxu0 0.0
    %646 = vmatprep.subr.mxu0 0.0
    %647 = vmatpush1.msra.mxu0 0.0
    %648 = vmatprep.subr.mxu0 0.0
    %649 = vmatpush1.msra.mxu0 0.0
    %650 = vmatprep.subr.mxu0 0.0
    %651 = vmatpush1.msra.mxu0 0.0
    %652 = vmatprep.subr.mxu0 0.0
    %653 = vmatpush1.msra.mxu0 0.0
    %654 = vmatprep.subr.mxu0 0.0
    %655 = vmatpush1.msra.mxu0 0.0
    %656 = vmatprep.subr.mxu0 0.0
    %657 = vmatpush1.msra.mxu0 0.0
    %658 = vmatprep.subr.mxu0 0.0
    %659 = vmatpush1.msra.mxu0 0.0
    %660 = vmatprep.subr.mxu0 0.0
    %661 = vmatpush1.msra.mxu0 0.0
    %662 = vmatprep.subr.mxu0 0.0
    %663 = vmatpush1.msra.mxu0 0.0
    %664 = vmatprep.mubr.f32.mxu0 0.0
    %665 = vmatmul.mubr.f32.gmra.mrb[0].mxu0 %v586
    %v666 = vpop.f32.mrb[0].mxu0
    %v667 = vadd.f32 0.0, %v666
    %v668 = vpop.f32.mrb[0].mxu0
    %669 = vmatprep.mubr.f32.mxu0 0.0
    %670 = vmatmul.mubr.f32.gmra.mrb[0].mxu0 %v589
    %v671 = vpop.f32.mrb[0].mxu0
    %v672 = vadd.f32 0.0, %v671
    %v673 = vpop.f32.mrb[0].mxu0
    %674 = vmatprep.mubr.f32.mxu0 0.0
    %675 = vmatmul.mubr.f32.gmra.mrb[0].mxu0 %v592
    %v676 = vpop.f32.mrb[0].mxu0
    %v677 = vadd.f32 0.0, %v676
    %v678 = vpop.f32.mrb[0].mxu0
    %679 = vmatprep.mubr.f32.mxu0 0.0
    %680 = vmatmul.mubr.f32.gmra.mrb[0].mxu0 %v595
    %v681 = vpop.f32.mrb[0].mxu0
    %v682 = vadd.f32 0.0, %v681
    %v683 = vpop.f32.mrb[0].mxu0
    %684 = vdwg.mxu0
    %v685 = vadd.f32 %v461, %v667
    %v686 = vadd.f32 %v466, %v672
    %v687 = vadd.f32 %v471, %v677
    %v688 = vadd.f32 %v476, %v682
    %v689 = vld [vmem:[%s3] sm:$0x1]
    %v691 = vlaneseq
    %v692 = vshrl.u32 %v691, 7
    %v693 = vsub.s32 0, %v692
    %v694 = vrot.slane %v689, %v693
    %v696 = vadd.f32 %v685, %v694
    %v697 = vadd.f32 %v686, %v694
    %v698 = vadd.f32 %v687, %v694
    %v699 = vadd.f32 %v688, %v694
    %v700 = vmax.f32 %v696, 0.0
    %v701 = vmax.f32 %v697, 0.0
    %v702 = vmax.f32 %v698, 0.0
    %v703 = vmax.f32 %v699, 0.0
    %v704 = vld [vmem:[%s4] sm:$0xff]
    %v705 = vld [vmem:[%s4 + $0x8] sm:$0xff]
    %v706 = vld [vmem:[%s4 + $0x10] sm:$0xf]
    %vm707 = vcmask 261120
    %v709 = vsel %vm707, %v704, 0
    %v712 = vsel %vm707, %v705, 0
    %v715 = vsel %vm707, %v706, 0
    %717 = vmatprep.subr.mxu0 0.0
    %718 = vmatpush1.msra.mxu0 %v700
    %719 = vmatprep.subr.mxu0 0.0
    %720 = vmatpush1.msra.mxu0 %v701
    %721 = vmatprep.subr.mxu0 0.0
    %722 = vmatpush1.msra.mxu0 %v702
    %723 = vmatprep.subr.mxu0 0.0
    %724 = vmatpush1.msra.mxu0 %v703
    %725 = vmatprep.subr.mxu0 0.0
    %726 = vmatpush1.msra.mxu0 0.0
    %727 = vmatprep.subr.mxu0 0.0
    %728 = vmatpush1.msra.mxu0 0.0
    %729 = vmatprep.subr.mxu0 0.0
    %730 = vmatpush1.msra.mxu0 0.0
    %731 = vmatprep.subr.mxu0 0.0
    %732 = vmatpush1.msra.mxu0 0.0
    %733 = vmatprep.subr.mxu0 0.0
    %734 = vmatpush1.msra.mxu0 0.0
    %735 = vmatprep.subr.mxu0 0.0
    %736 = vmatpush1.msra.mxu0 0.0
    %737 = vmatprep.subr.mxu0 0.0
    %738 = vmatpush1.msra.mxu0 0.0
    %739 = vmatprep.subr.mxu0 0.0
    %740 = vmatpush1.msra.mxu0 0.0
    %741 = vmatprep.subr.mxu0 0.0
    %742 = vmatpush1.msra.mxu0 0.0
    %743 = vmatprep.subr.mxu0 0.0
    %744 = vmatpush1.msra.mxu0 0.0
    %745 = vmatprep.subr.mxu0 0.0
    %746 = vmatpush1.msra.mxu0 0.0
    %747 = vmatprep.subr.mxu0 0.0
    %748 = vmatpush1.msra.mxu0 0.0
    %749 = vmatprep.subr.mxu0 0.0
    %750 = vmatpush1.msra.mxu0 0.0
    %751 = vmatprep.subr.mxu0 0.0
    %752 = vmatpush1.msra.mxu0 0.0
    %753 = vmatprep.subr.mxu0 0.0
    %754 = vmatpush1.msra.mxu0 0.0
    %755 = vmatprep.subr.mxu0 0.0
    %756 = vmatpush1.msra.mxu0 0.0
    %757 = vmatprep.subr.mxu0 0.0
    %758 = vmatpush1.msra.mxu0 0.0
    %759 = vmatprep.subr.mxu0 0.0
    %760 = vmatpush1.msra.mxu0 0.0
    %761 = vmatprep.subr.mxu0 0.0
    %762 = vmatpush1.msra.mxu0 0.0
    %763 = vmatprep.subr.mxu0 0.0
    %764 = vmatpush1.msra.mxu0 0.0
    %765 = vmatprep.subr.mxu0 0.0
    %766 = vmatpush1.msra.mxu0 0.0
    %767 = vmatprep.subr.mxu0 0.0
    %768 = vmatpush1.msra.mxu0 0.0
    %769 = vmatprep.subr.mxu0 0.0
    %770 = vmatpush1.msra.mxu0 0.0
    %771 = vmatprep.subr.mxu0 0.0
    %772 = vmatpush1.msra.mxu0 0.0
    %773 = vmatprep.subr.mxu0 0.0
    %774 = vmatpush1.msra.mxu0 0.0
    %775 = vmatprep.subr.mxu0 0.0
    %776 = vmatpush1.msra.mxu0 0.0
    %777 = vmatprep.subr.mxu0 0.0
    %778 = vmatpush1.msra.mxu0 0.0
    %779 = vmatprep.subr.mxu0 0.0
    %780 = vmatpush1.msra.mxu0 0.0
    %781 = vmatprep.mubr.f32.mxu0 0.0
    %782 = vmatmul.mubr.f32.gmra.mrb[0].mxu0 %v709
    %v783 = vpop.f32.mrb[0].mxu0
    %v784 = vadd.f32 0.0, %v783
    %v785 = vpop.f32.mrb[0].mxu0
    %786 = vmatprep.mubr.f32.mxu0 0.0
    %787 = vmatmul.mubr.f32.gmra.mrb[0].mxu0 %v712
    %v788 = vpop.f32.mrb[0].mxu0
    %v789 = vadd.f32 0.0, %v788
    %v790 = vpop.f32.mrb[0].mxu0
    %791 = vmatprep.mubr.f32.mxu0 0.0
    %792 = vmatmul.mubr.f32.gmra.mrb[0].mxu0 %v715
    %v793 = vpop.f32.mrb[0].mxu0
    %v794 = vadd.f32 0.0, %v793
    %v795 = vpop.f32.mrb[0].mxu0
    %796 = vdwg.mxu0
    %s797 = scalar_lea.vmem %s4, 24
    %v798 = vld [vmem:[%s797] sm:$0xff]
    %v799 = vld [vmem:[%s797 + $0x8] sm:$0xff]
    %v800 = vld [vmem:[%s797 + $0x10] sm:$0xf]
    %v802 = vsel %vm707, %v798, 0
    %v805 = vsel %vm707, %v799, 0
    %v808 = vsel %vm707, %v800, 0
    %810 = vmatprep.subr.mxu0 0.0
    %811 = vmatpush1.msra.mxu0 %v700
    %812 = vmatprep.subr.mxu0 0.0
    %813 = vmatpush1.msra.mxu0 %v701
    %814 = vmatprep.subr.mxu0 0.0
    %815 = vmatpush1.msra.mxu0 %v702
    %816 = vmatprep.subr.mxu0 0.0
    %817 = vmatpush1.msra.mxu0 %v703
    %818 = vmatprep.subr.mxu0 0.0
    %819 = vmatpush1.msra.mxu0 0.0
    %820 = vmatprep.subr.mxu0 0.0
    %821 = vmatpush1.msra.mxu0 0.0
    %822 = vmatprep.subr.mxu0 0.0
    %823 = vmatpush1.msra.mxu0 0.0
    %824 = vmatprep.subr.mxu0 0.0
    %825 = vmatpush1.msra.mxu0 0.0
    %826 = vmatprep.subr.mxu0 0.0
    %827 = vmatpush1.msra.mxu0 0.0
    %828 = vmatprep.subr.mxu0 0.0
    %829 = vmatpush1.msra.mxu0 0.0
    %830 = vmatprep.subr.mxu0 0.0
    %831 = vmatpush1.msra.mxu0 0.0
    %832 = vmatprep.subr.mxu0 0.0
    %833 = vmatpush1.msra.mxu0 0.0
    %834 = vmatprep.subr.mxu0 0.0
    %835 = vmatpush1.msra.mxu0 0.0
    %836 = vmatprep.subr.mxu0 0.0
    %837 = vmatpush1.msra.mxu0 0.0
    %838 = vmatprep.subr.mxu0 0.0
    %839 = vmatpush1.msra.mxu0 0.0
    %840 = vmatprep.subr.mxu0 0.0
    %841 = vmatpush1.msra.mxu0 0.0
    %842 = vmatprep.subr.mxu0 0.0
    %843 = vmatpush1.msra.mxu0 0.0
    %844 = vmatprep.subr.mxu0 0.0
    %845 = vmatpush1.msra.mxu0 0.0
    %846 = vmatprep.subr.mxu0 0.0
    %847 = vmatpush1.msra.mxu0 0.0
    %848 = vmatprep.subr.mxu0 0.0
    %849 = vmatpush1.msra.mxu0 0.0
    %850 = vmatprep.subr.mxu0 0.0
    %851 = vmatpush1.msra.mxu0 0.0
    %852 = vmatprep.subr.mxu0 0.0
    %853 = vmatpush1.msra.mxu0 0.0
    %854 = vmatprep.subr.mxu0 0.0
    %855 = vmatpush1.msra.mxu0 0.0
    %856 = vmatprep.subr.mxu0 0.0
    %857 = vmatpush1.msra.mxu0 0.0
    %858 = vmatprep.subr.mxu0 0.0
    %859 = vmatpush1.msra.mxu0 0.0
    %860 = vmatprep.subr.mxu0 0.0
    %861 = vmatpush1.msra.mxu0 0.0
    %862 = vmatprep.subr.mxu0 0.0
    %863 = vmatpush1.msra.mxu0 0.0
    %864 = vmatprep.subr.mxu0 0.0
    %865 = vmatpush1.msra.mxu0 0.0
    %866 = vmatprep.subr.mxu0 0.0
    %867 = vmatpush1.msra.mxu0 0.0
    %868 = vmatprep.subr.mxu0 0.0
    %869 = vmatpush1.msra.mxu0 0.0
    %870 = vmatprep.subr.mxu0 0.0
    %871 = vmatpush1.msra.mxu0 0.0
    %872 = vmatprep.subr.mxu0 0.0
    %873 = vmatpush1.msra.mxu0 0.0
    %874 = vmatprep.mubr.f32.mxu0 0.0
    %875 = vmatmul.mubr.f32.gmra.mrb[0].mxu0 %v802
    %v876 = vpop.f32.mrb[0].mxu0
    %v877 = vadd.f32 0.0, %v876
    %v878 = vpop.f32.mrb[0].mxu0
    %879 = vmatprep.mubr.f32.mxu0 0.0
    %880 = vmatmul.mubr.f32.gmra.mrb[0].mxu0 %v805
    %v881 = vpop.f32.mrb[0].mxu0
    %v882 = vadd.f32 0.0, %v881
    %v883 = vpop.f32.mrb[0].mxu0
    %884 = vmatprep.mubr.f32.mxu0 0.0
    %885 = vmatmul.mubr.f32.gmra.mrb[0].mxu0 %v808
    %v886 = vpop.f32.mrb[0].mxu0
    %v887 = vadd.f32 0.0, %v886
    %v888 = vpop.f32.mrb[0].mxu0
    %889 = vdwg.mxu0
    %v890 = vmax.f32 %v784, %v877
    %v891 = vmax.f32 %v789, %v882
    %v892 = vmax.f32 %v794, %v887
    %v893 = vld [vmem:[%s5] sm:$0xff]
    %v894 = vld [vmem:[%s5 + $0x8] sm:$0xff]
    %v895 = vld [vmem:[%s5 + $0x10] sm:$0xff]
    %v896 = vld [vmem:[%s5 + $0x18] sm:$0xff]
    %v897 = vld [vmem:[%s5 + $0x20] sm:$0xff]
    %v898 = vld [vmem:[%s5 + $0x28] sm:$0xff]
    %v899 = vld [vmem:[%s5 + $0x30] sm:$0xff]
    %v900 = vld [vmem:[%s5 + $0x38] sm:$0xff]
    %vm901 = vcmask 523264
    %v903 = vsel %vm901, %v890, 0
    %v906 = vsel %vm901, %v891, 0
    %v909 = vsel %vm901, %v892, 0
    %911 = vmatprep.subr.mxu0 0.0
    %912 = vmatpush1.msra.mxu0 %v893
    %913 = vmatprep.subr.mxu0 0.0
    %914 = vmatpush1.msra.mxu0 %v894
    %915 = vmatprep.subr.mxu0 0.0
    %916 = vmatpush1.msra.mxu0 %v895
    %917 = vmatprep.subr.mxu0 0.0
    %918 = vmatpush1.msra.mxu0 %v896
    %919 = vmatprep.subr.mxu0 0.0
    %920 = vmatpush1.msra.mxu0 %v897
    %921 = vmatprep.subr.mxu0 0.0
    %922 = vmatpush1.msra.mxu0 %v898
    %923 = vmatprep.subr.mxu0 0.0
    %924 = vmatpush1.msra.mxu0 %v899
    %925 = vmatprep.subr.mxu0 0.0
    %926 = vmatpush1.msra.mxu0 %v900
    %927 = vmatprep.subr.mxu0 0.0
    %928 = vmatpush1.msra.mxu0 0.0
    %929 = vmatprep.subr.mxu0 0.0
    %930 = vmatpush1.msra.mxu0 0.0
    %931 = vmatprep.subr.mxu0 0.0
    %932 = vmatpush1.msra.mxu0 0.0
    %933 = vmatprep.subr.mxu0 0.0
    %934 = vmatpush1.msra.mxu0 0.0
    %935 = vmatprep.subr.mxu0 0.0
    %936 = vmatpush1.msra.mxu0 0.0
    %937 = vmatprep.subr.mxu0 0.0
    %938 = vmatpush1.msra.mxu0 0.0
    %939 = vmatprep.subr.mxu0 0.0
    %940 = vmatpush1.msra.mxu0 0.0
    %941 = vmatprep.subr.mxu0 0.0
    %942 = vmatpush1.msra.mxu0 0.0
    %943 = vmatprep.subr.mxu0 0.0
    %944 = vmatpush1.msra.mxu0 0.0
    %945 = vmatprep.subr.mxu0 0.0
    %946 = vmatpush1.msra.mxu0 0.0
    %947 = vmatprep.subr.mxu0 0.0
    %948 = vmatpush1.msra.mxu0 0.0
    %949 = vmatprep.subr.mxu0 0.0
    %950 = vmatpush1.msra.mxu0 0.0
    %951 = vmatprep.subr.mxu0 0.0
    %952 = vmatpush1.msra.mxu0 0.0
    %953 = vmatprep.subr.mxu0 0.0
    %954 = vmatpush1.msra.mxu0 0.0
    %955 = vmatprep.subr.mxu0 0.0
    %956 = vmatpush1.msra.mxu0 0.0
    %957 = vmatprep.subr.mxu0 0.0
    %958 = vmatpush1.msra.mxu0 0.0
    %959 = vmatprep.subr.mxu0 0.0
    %960 = vmatpush1.msra.mxu0 0.0
    %961 = vmatprep.subr.mxu0 0.0
    %962 = vmatpush1.msra.mxu0 0.0
    %963 = vmatprep.subr.mxu0 0.0
    %964 = vmatpush1.msra.mxu0 0.0
    %965 = vmatprep.subr.mxu0 0.0
    %966 = vmatpush1.msra.mxu0 0.0
    %967 = vmatprep.subr.mxu0 0.0
    %968 = vmatpush1.msra.mxu0 0.0
    %969 = vmatprep.subr.mxu0 0.0
    %970 = vmatpush1.msra.mxu0 0.0
    %971 = vmatprep.subr.mxu0 0.0
    %972 = vmatpush1.msra.mxu0 0.0
    %973 = vmatprep.subr.mxu0 0.0
    %974 = vmatpush1.msra.mxu0 0.0
    %975 = vmatprep.mubr.f32.mxu0 0.0
    %976 = vmatmul.mubr.f32.gmra.mrb[0].mxu0 %v903
    %v977 = vpop.f32.mrb[0].mxu0
    %v978 = vadd.f32 0.0, %v977
    %v979 = vpop.f32.mrb[0].mxu0
    %980 = vmatprep.mubr.f32.mxu0 0.0
    %981 = vmatmul.mubr.f32.gmra.mrb[0].mxu0 %v906
    %v982 = vpop.f32.mrb[0].mxu0
    %v983 = vadd.f32 0.0, %v982
    %v984 = vpop.f32.mrb[0].mxu0
    %985 = vmatprep.mubr.f32.mxu0 0.0
    %986 = vmatmul.mubr.f32.gmra.mrb[0].mxu0 %v909
    %v987 = vpop.f32.mrb[0].mxu0
    %v988 = vadd.f32 0.0, %v987
    %v989 = vpop.f32.mrb[0].mxu0
    %990 = vdwg.mxu0
    %s991 = scalar_lea.vmem %s5, 64
    %v992 = vld [vmem:[%s991] sm:$0xff]
    %v993 = vld [vmem:[%s991 + $0x8] sm:$0xff]
    %v994 = vld [vmem:[%s991 + $0x10] sm:$0xff]
    %v995 = vld [vmem:[%s991 + $0x18] sm:$0xff]
    %v996 = vld [vmem:[%s991 + $0x20] sm:$0xff]
    %v997 = vld [vmem:[%s991 + $0x28] sm:$0xff]
    %v998 = vld [vmem:[%s991 + $0x30] sm:$0xff]
    %v999 = vld [vmem:[%s991 + $0x38] sm:$0xff]
    %1000 = vmatprep.subr.mxu0 0.0
    %1001 = vmatpush1.msra.mxu0 %v992
    %1002 = vmatprep.subr.mxu0 0.0
    %1003 = vmatpush1.msra.mxu0 %v993
    %1004 = vmatprep.subr.mxu0 0.0
    %1005 = vmatpush1.msra.mxu0 %v994
    %1006 = vmatprep.subr.mxu0 0.0
    %1007 = vmatpush1.msra.mxu0 %v995
    %1008 = vmatprep.subr.mxu0 0.0
    %1009 = vmatpush1.msra.mxu0 %v996
    %1010 = vmatprep.subr.mxu0 0.0
    %1011 = vmatpush1.msra.mxu0 %v997
    %1012 = vmatprep.subr.mxu0 0.0
    %1013 = vmatpush1.msra.mxu0 %v998
    %1014 = vmatprep.subr.mxu0 0.0
    %1015 = vmatpush1.msra.mxu0 %v999
    %1016 = vmatprep.subr.mxu0 0.0
    %1017 = vmatpush1.msra.mxu0 0.0
    %1018 = vmatprep.subr.mxu0 0.0
    %1019 = vmatpush1.msra.mxu0 0.0
    %1020 = vmatprep.subr.mxu0 0.0
    %1021 = vmatpush1.msra.mxu0 0.0
    %1022 = vmatprep.subr.mxu0 0.0
    %1023 = vmatpush1.msra.mxu0 0.0
    %1024 = vmatprep.subr.mxu0 0.0
    %1025 = vmatpush1.msra.mxu0 0.0
    %1026 = vmatprep.subr.mxu0 0.0
    %1027 = vmatpush1.msra.mxu0 0.0
    %1028 = vmatprep.subr.mxu0 0.0
    %1029 = vmatpush1.msra.mxu0 0.0
    %1030 = vmatprep.subr.mxu0 0.0
    %1031 = vmatpush1.msra.mxu0 0.0
    %1032 = vmatprep.subr.mxu0 0.0
    %1033 = vmatpush1.msra.mxu0 0.0
    %1034 = vmatprep.subr.mxu0 0.0
    %1035 = vmatpush1.msra.mxu0 0.0
    %1036 = vmatprep.subr.mxu0 0.0
    %1037 = vmatpush1.msra.mxu0 0.0
    %1038 = vmatprep.subr.mxu0 0.0
    %1039 = vmatpush1.msra.mxu0 0.0
    %1040 = vmatprep.subr.mxu0 0.0
    %1041 = vmatpush1.msra.mxu0 0.0
    %1042 = vmatprep.subr.mxu0 0.0
    %1043 = vmatpush1.msra.mxu0 0.0
    %1044 = vmatprep.subr.mxu0 0.0
    %1045 = vmatpush1.msra.mxu0 0.0
    %1046 = vmatprep.subr.mxu0 0.0
    %1047 = vmatpush1.msra.mxu0 0.0
    %1048 = vmatprep.subr.mxu0 0.0
    %1049 = vmatpush1.msra.mxu0 0.0
    %1050 = vmatprep.subr.mxu0 0.0
    %1051 = vmatpush1.msra.mxu0 0.0
    %1052 = vmatprep.subr.mxu0 0.0
    %1053 = vmatpush1.msra.mxu0 0.0
    %1054 = vmatprep.subr.mxu0 0.0
    %1055 = vmatpush1.msra.mxu0 0.0
    %1056 = vmatprep.subr.mxu0 0.0
    %1057 = vmatpush1.msra.mxu0 0.0
    %1058 = vmatprep.subr.mxu0 0.0
    %1059 = vmatpush1.msra.mxu0 0.0
    %1060 = vmatprep.subr.mxu0 0.0
    %1061 = vmatpush1.msra.mxu0 0.0
    %1062 = vmatprep.subr.mxu0 0.0
    %1063 = vmatpush1.msra.mxu0 0.0
    %1064 = vmatprep.mubr.f32.mxu0 0.0
    %1065 = vmatmul.mubr.f32.gmra.mrb[0].mxu0 %v903
    %v1066 = vpop.f32.mrb[0].mxu0
    %v1067 = vadd.f32 0.0, %v1066
    %v1068 = vpop.f32.mrb[0].mxu0
    %1069 = vmatprep.mubr.f32.mxu0 0.0
    %1070 = vmatmul.mubr.f32.gmra.mrb[0].mxu0 %v906
    %v1071 = vpop.f32.mrb[0].mxu0
    %v1072 = vadd.f32 0.0, %v1071
    %v1073 = vpop.f32.mrb[0].mxu0
    %1074 = vmatprep.mubr.f32.mxu0 0.0
    %1075 = vmatmul.mubr.f32.gmra.mrb[0].mxu0 %v909
    %v1076 = vpop.f32.mrb[0].mxu0
    %v1077 = vadd.f32 0.0, %v1076
    %v1078 = vpop.f32.mrb[0].mxu0
    %1079 = vdwg.mxu0
    %v1080 = vmax.f32 %v978, %v1067
    %v1081 = vmax.f32 %v983, %v1072
    %v1082 = vmax.f32 %v988, %v1077
    %v1083 = vld [vmem:[%s6] sm:$0xff]
    %v1084 = vld [vmem:[%s6 + $0x8] sm:$0xff]
    %vm1085 = vcmask 162816
    %v1087 = vsel %vm1085, %v1083, 0
    %v1090 = vsel %vm1085, %v1084, 0
    %v1093 = vsel %vm79, %v1082, 0
    %1095 = vmatprep.subr.mxu0 0.0
    %1096 = vmatpush1.msra.mxu0 %v1080
    %1097 = vmatprep.subr.mxu0 0.0
    %1098 = vmatpush1.msra.mxu0 %v1081
    %1099 = vmatprep.subr.mxu0 0.0
    %1100 = vmatpush1.msra.mxu0 %v1093
    %1101 = vmatprep.subr.mxu0 0.0
    %1102 = vmatpush1.msra.mxu0 0.0
    %1103 = vmatprep.subr.mxu0 0.0
    %1104 = vmatpush1.msra.mxu0 0.0
    %1105 = vmatprep.subr.mxu0 0.0
    %1106 = vmatpush1.msra.mxu0 0.0
    %1107 = vmatprep.subr.mxu0 0.0
    %1108 = vmatpush1.msra.mxu0 0.0
    %1109 = vmatprep.subr.mxu0 0.0
    %1110 = vmatpush1.msra.mxu0 0.0
    %1111 = vmatprep.subr.mxu0 0.0
    %1112 = vmatpush1.msra.mxu0 0.0
    %1113 = vmatprep.subr.mxu0 0.0
    %1114 = vmatpush1.msra.mxu0 0.0
    %1115 = vmatprep.subr.mxu0 0.0
    %1116 = vmatpush1.msra.mxu0 0.0
    %1117 = vmatprep.subr.mxu0 0.0
    %1118 = vmatpush1.msra.mxu0 0.0
    %1119 = vmatprep.subr.mxu0 0.0
    %1120 = vmatpush1.msra.mxu0 0.0
    %1121 = vmatprep.subr.mxu0 0.0
    %1122 = vmatpush1.msra.mxu0 0.0
    %1123 = vmatprep.subr.mxu0 0.0
    %1124 = vmatpush1.msra.mxu0 0.0
    %1125 = vmatprep.subr.mxu0 0.0
    %1126 = vmatpush1.msra.mxu0 0.0
    %1127 = vmatprep.subr.mxu0 0.0
    %1128 = vmatpush1.msra.mxu0 0.0
    %1129 = vmatprep.subr.mxu0 0.0
    %1130 = vmatpush1.msra.mxu0 0.0
    %1131 = vmatprep.subr.mxu0 0.0
    %1132 = vmatpush1.msra.mxu0 0.0
    %1133 = vmatprep.subr.mxu0 0.0
    %1134 = vmatpush1.msra.mxu0 0.0
    %1135 = vmatprep.subr.mxu0 0.0
    %1136 = vmatpush1.msra.mxu0 0.0
    %1137 = vmatprep.subr.mxu0 0.0
    %1138 = vmatpush1.msra.mxu0 0.0
    %1139 = vmatprep.subr.mxu0 0.0
    %1140 = vmatpush1.msra.mxu0 0.0
    %1141 = vmatprep.subr.mxu0 0.0
    %1142 = vmatpush1.msra.mxu0 0.0
    %1143 = vmatprep.subr.mxu0 0.0
    %1144 = vmatpush1.msra.mxu0 0.0
    %1145 = vmatprep.subr.mxu0 0.0
    %1146 = vmatpush1.msra.mxu0 0.0
    %1147 = vmatprep.subr.mxu0 0.0
    %1148 = vmatpush1.msra.mxu0 0.0
    %1149 = vmatprep.subr.mxu0 0.0
    %1150 = vmatpush1.msra.mxu0 0.0
    %1151 = vmatprep.subr.mxu0 0.0
    %1152 = vmatpush1.msra.mxu0 0.0
    %1153 = vmatprep.subr.mxu0 0.0
    %1154 = vmatpush1.msra.mxu0 0.0
    %1155 = vmatprep.subr.mxu0 0.0
    %1156 = vmatpush1.msra.mxu0 0.0
    %1157 = vmatprep.subr.mxu0 0.0
    %1158 = vmatpush1.msra.mxu0 0.0
    %1159 = vmatprep.mubr.f32.mxu0 0.0
    %1160 = vmatmul.mubr.f32.gmra.mrb[0].mxu0 %v1087
    %v1161 = vpop.f32.mrb[0].mxu0
    %v1162 = vadd.f32 0.0, %v1161
    %v1163 = vpop.f32.mrb[0].mxu0
    %1164 = vmatprep.mubr.f32.mxu0 0.0
    %1165 = vmatmul.mubr.f32.gmra.mrb[0].mxu0 %v1090
    %v1166 = vpop.f32.mrb[0].mxu0
    %v1167 = vadd.f32 0.0, %v1166
    %v1168 = vpop.f32.mrb[0].mxu0
    %1169 = vdwg.mxu0
    %v1170 = vld [vmem:[%s7] sm:$0xff]
    %v1171 = vld [vmem:[%s7 + $0x8] sm:$0xff]
    %v1172 = vld [vmem:[%s7 + $0x10] sm:$0xff]
    %v1173 = vld [vmem:[%s7 + $0x18] sm:$0xff]
    %v1174 = vld [vmem:[%s7 + $0x20] sm:$0xff]
    %s1175 = scalar_lea.vmem %s6, 16
    %v1176 = vld [vmem:[%s1175] sm:$0xff]
    %v1177 = vld [vmem:[%s1175 + $0x8] sm:$0xff]
    %v1179 = vsel %vm1085, %v1176, 0
    %v1182 = vsel %vm1085, %v1177, 0
    %1184 = vmatprep.subr.mxu0 0.0
    %1185 = vmatpush1.msra.mxu0 %v1080
    %1186 = vmatprep.subr.mxu0 0.0
    %1187 = vmatpush1.msra.mxu0 %v1081
    %1188 = vmatprep.subr.mxu0 0.0
    %1189 = vmatpush1.msra.mxu0 %v1093
    %1190 = vmatprep.subr.mxu0 0.0
    %1191 = vmatpush1.msra.mxu0 0.0
    %1192 = vmatprep.subr.mxu0 0.0
    %1193 = vmatpush1.msra.mxu0 0.0
    %1194 = vmatprep.subr.mxu0 0.0
    %1195 = vmatpush1.msra.mxu0 0.0
    %1196 = vmatprep.subr.mxu0 0.0
    %1197 = vmatpush1.msra.mxu0 0.0
    %1198 = vmatprep.subr.mxu0 0.0
    %1199 = vmatpush1.msra.mxu0 0.0
    %1200 = vmatprep.subr.mxu0 0.0
    %1201 = vmatpush1.msra.mxu0 0.0
    %1202 = vmatprep.subr.mxu0 0.0
    %1203 = vmatpush1.msra.mxu0 0.0
    %1204 = vmatprep.subr.mxu0 0.0
    %1205 = vmatpush1.msra.mxu0 0.0
    %1206 = vmatprep.subr.mxu0 0.0
    %1207 = vmatpush1.msra.mxu0 0.0
    %1208 = vmatprep.subr.mxu0 0.0
    %1209 = vmatpush1.msra.mxu0 0.0
    %1210 = vmatprep.subr.mxu0 0.0
    %1211 = vmatpush1.msra.mxu0 0.0
    %1212 = vmatprep.subr.mxu0 0.0
    %1213 = vmatpush1.msra.mxu0 0.0
    %1214 = vmatprep.subr.mxu0 0.0
    %1215 = vmatpush1.msra.mxu0 0.0
    %1216 = vmatprep.subr.mxu0 0.0
    %1217 = vmatpush1.msra.mxu0 0.0
    %1218 = vmatprep.subr.mxu0 0.0
    %1219 = vmatpush1.msra.mxu0 0.0
    %1220 = vmatprep.subr.mxu0 0.0
    %1221 = vmatpush1.msra.mxu0 0.0
    %1222 = vmatprep.subr.mxu0 0.0
    %1223 = vmatpush1.msra.mxu0 0.0
    %1224 = vmatprep.subr.mxu0 0.0
    %1225 = vmatpush1.msra.mxu0 0.0
    %1226 = vmatprep.subr.mxu0 0.0
    %1227 = vmatpush1.msra.mxu0 0.0
    %1228 = vmatprep.subr.mxu0 0.0
    %1229 = vmatpush1.msra.mxu0 0.0
    %1230 = vmatprep.subr.mxu0 0.0
    %1231 = vmatpush1.msra.mxu0 0.0
    %1232 = vmatprep.subr.mxu0 0.0
    %1233 = vmatpush1.msra.mxu0 0.0
    %1234 = vmatprep.subr.mxu0 0.0
    %1235 = vmatpush1.msra.mxu0 0.0
    %1236 = vmatprep.subr.mxu0 0.0
    %1237 = vmatpush1.msra.mxu0 0.0
    %1238 = vmatprep.subr.mxu0 0.0
    %1239 = vmatpush1.msra.mxu0 0.0
    %1240 = vmatprep.subr.mxu0 0.0
    %1241 = vmatpush1.msra.mxu0 0.0
    %1242 = vmatprep.subr.mxu0 0.0
    %1243 = vmatpush1.msra.mxu0 0.0
    %1244 = vmatprep.subr.mxu0 0.0
    %1245 = vmatpush1.msra.mxu0 0.0
    %1246 = vmatprep.subr.mxu0 0.0
    %1247 = vmatpush1.msra.mxu0 0.0
    %1248 = vmatprep.mubr.f32.mxu0 0.0
    %1249 = vmatmul.mubr.f32.gmra.mrb[0].mxu0 %v1179
    %v1250 = vpop.f32.mrb[0].mxu0
    %v1251 = vadd.f32 0.0, %v1250
    %v1252 = vpop.f32.mrb[0].mxu0
    %1253 = vmatprep.mubr.f32.mxu0 0.0
    %1254 = vmatmul.mubr.f32.gmra.mrb[0].mxu0 %v1182
    %v1255 = vpop.f32.mrb[0].mxu0
    %v1256 = vadd.f32 0.0, %v1255
    %v1257 = vpop.f32.mrb[0].mxu0
    %1258 = vdwg.mxu0
    %s1259 = scalar_lea.vmem %s7, 40
    %v1260 = vld [vmem:[%s1259] sm:$0xff]
    %v1261 = vld [vmem:[%s1259 + $0x8] sm:$0xff]
    %v1262 = vld [vmem:[%s1259 + $0x10] sm:$0xff]
    %v1263 = vld [vmem:[%s1259 + $0x18] sm:$0xff]
    %v1264 = vld [vmem:[%s1259 + $0x20] sm:$0xff]
    %vm1265 = vcmask 326656
    %v1267 = vsel %vm1265, %v1251, 0
    %v1270 = vsel %vm1265, %v1256, 0
    %1272 = vmatprep.subr.mxu0 0.0
    %1273 = vmatpush1.msra.mxu0 %v1260
    %1274 = vmatprep.subr.mxu0 0.0
    %1275 = vmatpush1.msra.mxu0 %v1261
    %1276 = vmatprep.subr.mxu0 0.0
    %1277 = vmatpush1.msra.mxu0 %v1262
    %1278 = vmatprep.subr.mxu0 0.0
    %1279 = vmatpush1.msra.mxu0 %v1263
    %1280 = vmatprep.subr.mxu0 0.0
    %1281 = vmatpush1.msra.mxu0 %v1264
    %1282 = vmatprep.subr.mxu0 0.0
    %1283 = vmatpush1.msra.mxu0 0.0
    %1284 = vmatprep.subr.mxu0 0.0
    %1285 = vmatpush1.msra.mxu0 0.0
    %1286 = vmatprep.subr.mxu0 0.0
    %1287 = vmatpush1.msra.mxu0 0.0
    %1288 = vmatprep.subr.mxu0 0.0
    %1289 = vmatpush1.msra.mxu0 0.0
    %1290 = vmatprep.subr.mxu0 0.0
    %1291 = vmatpush1.msra.mxu0 0.0
    %1292 = vmatprep.subr.mxu0 0.0
    %1293 = vmatpush1.msra.mxu0 0.0
    %1294 = vmatprep.subr.mxu0 0.0
    %1295 = vmatpush1.msra.mxu0 0.0
    %1296 = vmatprep.subr.mxu0 0.0
    %1297 = vmatpush1.msra.mxu0 0.0
    %1298 = vmatprep.subr.mxu0 0.0
    %1299 = vmatpush1.msra.mxu0 0.0
    %1300 = vmatprep.subr.mxu0 0.0
    %1301 = vmatpush1.msra.mxu0 0.0
    %1302 = vmatprep.subr.mxu0 0.0
    %1303 = vmatpush1.msra.mxu0 0.0
    %1304 = vmatprep.subr.mxu0 0.0
    %1305 = vmatpush1.msra.mxu0 0.0
    %1306 = vmatprep.subr.mxu0 0.0
    %1307 = vmatpush1.msra.mxu0 0.0
    %1308 = vmatprep.subr.mxu0 0.0
    %1309 = vmatpush1.msra.mxu0 0.0
    %1310 = vmatprep.subr.mxu0 0.0
    %1311 = vmatpush1.msra.mxu0 0.0
    %1312 = vmatprep.subr.mxu0 0.0
    %1313 = vmatpush1.msra.mxu0 0.0
    %1314 = vmatprep.subr.mxu0 0.0
    %1315 = vmatpush1.msra.mxu0 0.0
    %1316 = vmatprep.subr.mxu0 0.0
    %1317 = vmatpush1.msra.mxu0 0.0
    %1318 = vmatprep.subr.mxu0 0.0
    %1319 = vmatpush1.msra.mxu0 0.0
    %1320 = vmatprep.subr.mxu0 0.0
    %1321 = vmatpush1.msra.mxu0 0.0
    %1322 = vmatprep.subr.mxu0 0.0
    %1323 = vmatpush1.msra.mxu0 0.0
    %1324 = vmatprep.subr.mxu0 0.0
    %1325 = vmatpush1.msra.mxu0 0.0
    %1326 = vmatprep.subr.mxu0 0.0
    %1327 = vmatpush1.msra.mxu0 0.0
    %1328 = vmatprep.subr.mxu0 0.0
    %1329 = vmatpush1.msra.mxu0 0.0
    %1330 = vmatprep.subr.mxu0 0.0
    %1331 = vmatpush1.msra.mxu0 0.0
    %1332 = vmatprep.subr.mxu0 0.0
    %1333 = vmatpush1.msra.mxu0 0.0
    %1334 = vmatprep.subr.mxu0 0.0
    %1335 = vmatpush1.msra.mxu0 0.0
    %1336 = vmatprep.mubr.f32.mxu0 0.0
    %1337 = vmatmul.mubr.f32.gmra.mrb[0].mxu0 %v1267
    %v1338 = vpop.f32.mrb[0].mxu0
    %v1339 = vadd.f32 0.0, %v1338
    %v1340 = vpop.f32.mrb[0].mxu0
    %1341 = vmatprep.mubr.f32.mxu0 0.0
    %1342 = vmatmul.mubr.f32.gmra.mrb[0].mxu0 %v1270
    %v1343 = vpop.f32.mrb[0].mxu0
    %v1344 = vadd.f32 0.0, %v1343
    %v1345 = vpop.f32.mrb[0].mxu0
    %1346 = vdwg.mxu0
    %v1348 = vsel %vm1265, %v1162, 0
    %v1351 = vsel %vm1265, %v1167, 0
    %1353 = vmatprep.subr.mxu0 0.0
    %1354 = vmatpush1.msra.mxu0 %v1170
    %1355 = vmatprep.subr.mxu0 0.0
    %1356 = vmatpush1.msra.mxu0 %v1171
    %1357 = vmatprep.subr.mxu0 0.0
    %1358 = vmatpush1.msra.mxu0 %v1172
    %1359 = vmatprep.subr.mxu0 0.0
    %1360 = vmatpush1.msra.mxu0 %v1173
    %1361 = vmatprep.subr.mxu0 0.0
    %1362 = vmatpush1.msra.mxu0 %v1174
    %1363 = vmatprep.subr.mxu0 0.0
    %1364 = vmatpush1.msra.mxu0 0.0
    %1365 = vmatprep.subr.mxu0 0.0
    %1366 = vmatpush1.msra.mxu0 0.0
    %1367 = vmatprep.subr.mxu0 0.0
    %1368 = vmatpush1.msra.mxu0 0.0
    %1369 = vmatprep.subr.mxu0 0.0
    %1370 = vmatpush1.msra.mxu0 0.0
    %1371 = vmatprep.subr.mxu0 0.0
    %1372 = vmatpush1.msra.mxu0 0.0
    %1373 = vmatprep.subr.mxu0 0.0
    %1374 = vmatpush1.msra.mxu0 0.0
    %1375 = vmatprep.subr.mxu0 0.0
    %1376 = vmatpush1.msra.mxu0 0.0
    %1377 = vmatprep.subr.mxu0 0.0
    %1378 = vmatpush1.msra.mxu0 0.0
    %1379 = vmatprep.subr.mxu0 0.0
    %1380 = vmatpush1.msra.mxu0 0.0
    %1381 = vmatprep.subr.mxu0 0.0
    %1382 = vmatpush1.msra.mxu0 0.0
    %1383 = vmatprep.subr.mxu0 0.0
    %1384 = vmatpush1.msra.mxu0 0.0
    %1385 = vmatprep.subr.mxu0 0.0
    %1386 = vmatpush1.msra.mxu0 0.0
    %1387 = vmatprep.subr.mxu0 0.0
    %1388 = vmatpush1.msra.mxu0 0.0
    %1389 = vmatprep.subr.mxu0 0.0
    %1390 = vmatpush1.msra.mxu0 0.0
    %1391 = vmatprep.subr.mxu0 0.0
    %1392 = vmatpush1.msra.mxu0 0.0
    %1393 = vmatprep.subr.mxu0 0.0
    %1394 = vmatpush1.msra.mxu0 0.0
    %1395 = vmatprep.subr.mxu0 0.0
    %1396 = vmatpush1.msra.mxu0 0.0
    %1397 = vmatprep.subr.mxu0 0.0
    %1398 = vmatpush1.msra.mxu0 0.0
    %1399 = vmatprep.subr.mxu0 0.0
    %1400 = vmatpush1.msra.mxu0 0.0
    %1401 = vmatprep.subr.mxu0 0.0
    %1402 = vmatpush1.msra.mxu0 0.0
    %1403 = vmatprep.subr.mxu0 0.0
    %1404 = vmatpush1.msra.mxu0 0.0
    %1405 = vmatprep.subr.mxu0 0.0
    %1406 = vmatpush1.msra.mxu0 0.0
    %1407 = vmatprep.subr.mxu0 0.0
    %1408 = vmatpush1.msra.mxu0 0.0
    %1409 = vmatprep.subr.mxu0 0.0
    %1410 = vmatpush1.msra.mxu0 0.0
    %1411 = vmatprep.subr.mxu0 0.0
    %1412 = vmatpush1.msra.mxu0 0.0
    %1413 = vmatprep.subr.mxu0 0.0
    %1414 = vmatpush1.msra.mxu0 0.0
    %1415 = vmatprep.subr.mxu0 0.0
    %1416 = vmatpush1.msra.mxu0 0.0
    %1417 = vmatprep.mubr.f32.mxu0 0.0
    %1418 = vmatmul.mubr.f32.gmra.mrb[0].mxu0 %v1348
    %v1419 = vpop.f32.mrb[0].mxu0
    %v1420 = vadd.f32 %v1339, %v1419
    %v1421 = vpop.f32.mrb[0].mxu0
    %1422 = vmatprep.mubr.f32.mxu0 0.0
    %1423 = vmatmul.mubr.f32.gmra.mrb[0].mxu0 %v1351
    %v1424 = vpop.f32.mrb[0].mxu0
    %v1425 = vadd.f32 %v1344, %v1424
    %v1426 = vpop.f32.mrb[0].mxu0
    %1427 = vdwg.mxu0
    %s1428 = scalar_lea.vmem %s6, 32
    %v1429 = vld [vmem:[%s1428] sm:$0xff]
    %v1430 = vld [vmem:[%s1428 + $0x8] sm:$0xff]
    %v1432 = vsel %vm1085, %v1429, 0
    %v1435 = vsel %vm1085, %v1430, 0
    %1437 = vmatprep.subr.mxu0 0.0
    %1438 = vmatpush1.msra.mxu0 %v1080
    %1439 = vmatprep.subr.mxu0 0.0
    %1440 = vmatpush1.msra.mxu0 %v1081
    %1441 = vmatprep.subr.mxu0 0.0
    %1442 = vmatpush1.msra.mxu0 %v1093
    %1443 = vmatprep.subr.mxu0 0.0
    %1444 = vmatpush1.msra.mxu0 0.0
    %1445 = vmatprep.subr.mxu0 0.0
    %1446 = vmatpush1.msra.mxu0 0.0
    %1447 = vmatprep.subr.mxu0 0.0
    %1448 = vmatpush1.msra.mxu0 0.0
    %1449 = vmatprep.subr.mxu0 0.0
    %1450 = vmatpush1.msra.mxu0 0.0
    %1451 = vmatprep.subr.mxu0 0.0
    %1452 = vmatpush1.msra.mxu0 0.0
    %1453 = vmatprep.subr.mxu0 0.0
    %1454 = vmatpush1.msra.mxu0 0.0
    %1455 = vmatprep.subr.mxu0 0.0
    %1456 = vmatpush1.msra.mxu0 0.0
    %1457 = vmatprep.subr.mxu0 0.0
    %1458 = vmatpush1.msra.mxu0 0.0
    %1459 = vmatprep.subr.mxu0 0.0
    %1460 = vmatpush1.msra.mxu0 0.0
    %1461 = vmatprep.subr.mxu0 0.0
    %1462 = vmatpush1.msra.mxu0 0.0
    %1463 = vmatprep.subr.mxu0 0.0
    %1464 = vmatpush1.msra.mxu0 0.0
    %1465 = vmatprep.subr.mxu0 0.0
    %1466 = vmatpush1.msra.mxu0 0.0
    %1467 = vmatprep.subr.mxu0 0.0
    %1468 = vmatpush1.msra.mxu0 0.0
    %1469 = vmatprep.subr.mxu0 0.0
    %1470 = vmatpush1.msra.mxu0 0.0
    %1471 = vmatprep.subr.mxu0 0.0
    %1472 = vmatpush1.msra.mxu0 0.0
    %1473 = vmatprep.subr.mxu0 0.0
    %1474 = vmatpush1.msra.mxu0 0.0
    %1475 = vmatprep.subr.mxu0 0.0
    %1476 = vmatpush1.msra.mxu0 0.0
    %1477 = vmatprep.subr.mxu0 0.0
    %1478 = vmatpush1.msra.mxu0 0.0
    %1479 = vmatprep.subr.mxu0 0.0
    %1480 = vmatpush1.msra.mxu0 0.0
    %1481 = vmatprep.subr.mxu0 0.0
    %1482 = vmatpush1.msra.mxu0 0.0
    %1483 = vmatprep.subr.mxu0 0.0
    %1484 = vmatpush1.msra.mxu0 0.0
    %1485 = vmatprep.subr.mxu0 0.0
    %1486 = vmatpush1.msra.mxu0 0.0
    %1487 = vmatprep.subr.mxu0 0.0
    %1488 = vmatpush1.msra.mxu0 0.0
    %1489 = vmatprep.subr.mxu0 0.0
    %1490 = vmatpush1.msra.mxu0 0.0
    %1491 = vmatprep.subr.mxu0 0.0
    %1492 = vmatpush1.msra.mxu0 0.0
    %1493 = vmatprep.subr.mxu0 0.0
    %1494 = vmatpush1.msra.mxu0 0.0
    %1495 = vmatprep.subr.mxu0 0.0
    %1496 = vmatpush1.msra.mxu0 0.0
    %1497 = vmatprep.subr.mxu0 0.0
    %1498 = vmatpush1.msra.mxu0 0.0
    %1499 = vmatprep.subr.mxu0 0.0
    %1500 = vmatpush1.msra.mxu0 0.0
    %1501 = vmatprep.mubr.f32.mxu0 0.0
    %1502 = vmatmul.mubr.f32.gmra.mrb[0].mxu0 %v1432
    %v1503 = vpop.f32.mrb[0].mxu0
    %v1504 = vadd.f32 0.0, %v1503
    %v1505 = vpop.f32.mrb[0].mxu0
    %1506 = vmatprep.mubr.f32.mxu0 0.0
    %1507 = vmatmul.mubr.f32.gmra.mrb[0].mxu0 %v1435
    %v1508 = vpop.f32.mrb[0].mxu0
    %v1509 = vadd.f32 0.0, %v1508
    %v1510 = vpop.f32.mrb[0].mxu0
    %1511 = vdwg.mxu0
    %s1512 = scalar_lea.vmem %s7, 80
    %v1513 = vld [vmem:[%s1512] sm:$0xff]
    %v1514 = vld [vmem:[%s1512 + $0x8] sm:$0xff]
    %v1515 = vld [vmem:[%s1512 + $0x10] sm:$0xff]
    %v1516 = vld [vmem:[%s1512 + $0x18] sm:$0xff]
    %v1517 = vld [vmem:[%s1512 + $0x20] sm:$0xff]
    %v1519 = vsel %vm1265, %v1504, 0
    %v1522 = vsel %vm1265, %v1509, 0
    %1524 = vmatprep.subr.mxu0 0.0
    %1525 = vmatpush1.msra.mxu0 %v1513
    %1526 = vmatprep.subr.mxu0 0.0
    %1527 = vmatpush1.msra.mxu0 %v1514
    %1528 = vmatprep.subr.mxu0 0.0
    %1529 = vmatpush1.msra.mxu0 %v1515
    %1530 = vmatprep.subr.mxu0 0.0
    %1531 = vmatpush1.msra.mxu0 %v1516
    %1532 = vmatprep.subr.mxu0 0.0
    %1533 = vmatpush1.msra.mxu0 %v1517
    %1534 = vmatprep.subr.mxu0 0.0
    %1535 = vmatpush1.msra.mxu0 0.0
    %1536 = vmatprep.subr.mxu0 0.0
    %1537 = vmatpush1.msra.mxu0 0.0
    %1538 = vmatprep.subr.mxu0 0.0
    %1539 = vmatpush1.msra.mxu0 0.0
    %1540 = vmatprep.subr.mxu0 0.0
    %1541 = vmatpush1.msra.mxu0 0.0
    %1542 = vmatprep.subr.mxu0 0.0
    %1543 = vmatpush1.msra.mxu0 0.0
    %1544 = vmatprep.subr.mxu0 0.0
    %1545 = vmatpush1.msra.mxu0 0.0
    %1546 = vmatprep.subr.mxu0 0.0
    %1547 = vmatpush1.msra.mxu0 0.0
    %1548 = vmatprep.subr.mxu0 0.0
    %1549 = vmatpush1.msra.mxu0 0.0
    %1550 = vmatprep.subr.mxu0 0.0
    %1551 = vmatpush1.msra.mxu0 0.0
    %1552 = vmatprep.subr.mxu0 0.0
    %1553 = vmatpush1.msra.mxu0 0.0
    %1554 = vmatprep.subr.mxu0 0.0
    %1555 = vmatpush1.msra.mxu0 0.0
    %1556 = vmatprep.subr.mxu0 0.0
    %1557 = vmatpush1.msra.mxu0 0.0
    %1558 = vmatprep.subr.mxu0 0.0
    %1559 = vmatpush1.msra.mxu0 0.0
    %1560 = vmatprep.subr.mxu0 0.0
    %1561 = vmatpush1.msra.mxu0 0.0
    %1562 = vmatprep.subr.mxu0 0.0
    %1563 = vmatpush1.msra.mxu0 0.0
    %1564 = vmatprep.subr.mxu0 0.0
    %1565 = vmatpush1.msra.mxu0 0.0
    %1566 = vmatprep.subr.mxu0 0.0
    %1567 = vmatpush1.msra.mxu0 0.0
    %1568 = vmatprep.subr.mxu0 0.0
    %1569 = vmatpush1.msra.mxu0 0.0
    %1570 = vmatprep.subr.mxu0 0.0
    %1571 = vmatpush1.msra.mxu0 0.0
    %1572 = vmatprep.subr.mxu0 0.0
    %1573 = vmatpush1.msra.mxu0 0.0
    %1574 = vmatprep.subr.mxu0 0.0
    %1575 = vmatpush1.msra.mxu0 0.0
    %1576 = vmatprep.subr.mxu0 0.0
    %1577 = vmatpush1.msra.mxu0 0.0
    %1578 = vmatprep.subr.mxu0 0.0
    %1579 = vmatpush1.msra.mxu0 0.0
    %1580 = vmatprep.subr.mxu0 0.0
    %1581 = vmatpush1.msra.mxu0 0.0
    %1582 = vmatprep.subr.mxu0 0.0
    %1583 = vmatpush1.msra.mxu0 0.0
    %1584 = vmatprep.subr.mxu0 0.0
    %1585 = vmatpush1.msra.mxu0 0.0
    %1586 = vmatprep.subr.mxu0 0.0
    %1587 = vmatpush1.msra.mxu0 0.0
    %1588 = vmatprep.mubr.f32.mxu0 0.0
    %1589 = vmatmul.mubr.f32.gmra.mrb[0].mxu0 %v1519
    %v1590 = vpop.f32.mrb[0].mxu0
    %v1591 = vadd.f32 0.0, %v1590
    %v1592 = vpop.f32.mrb[0].mxu0
    %1593 = vmatprep.mubr.f32.mxu0 0.0
    %1594 = vmatmul.mubr.f32.gmra.mrb[0].mxu0 %v1522
    %v1595 = vpop.f32.mrb[0].mxu0
    %v1596 = vadd.f32 0.0, %v1595
    %v1597 = vpop.f32.mrb[0].mxu0
    %1598 = vdwg.mxu0
    %v1599 = vadd.f32 %v1420, %v1591
    %v1600 = vadd.f32 %v1425, %v1596
    %v1601 = vld [vmem:[%s8] sm:$0x1]
    %v1603 = vlaneseq
    %v1604 = vshrl.u32 %v1603, 7
    %v1605 = vsub.s32 0, %v1604
    %v1606 = vrot.slane %v1601, %v1605
    %v1608 = vadd.f32 %v1599, %v1606
    %v1609 = vadd.f32 %v1600, %v1606
    %v1610 = vmax.f32 %v1608, 0.0
    %v1611 = vmax.f32 %v1609, 0.0
    %v1612 = vld [vmem:[%s9] sm:$0xff]
    %vm1613 = vcmask 130048
    %v1615 = vsel %vm1613, %v1612, 0
    %1617 = vmatprep.subr.mxu0 0.0
    %1618 = vmatpush1.msra.mxu0 %v1610
    %1619 = vmatprep.subr.mxu0 0.0
    %1620 = vmatpush1.msra.mxu0 %v1611
    %1621 = vmatprep.subr.mxu0 0.0
    %1622 = vmatpush1.msra.mxu0 0.0
    %1623 = vmatprep.subr.mxu0 0.0
    %1624 = vmatpush1.msra.mxu0 0.0
    %1625 = vmatprep.subr.mxu0 0.0
    %1626 = vmatpush1.msra.mxu0 0.0
    %1627 = vmatprep.subr.mxu0 0.0
    %1628 = vmatpush1.msra.mxu0 0.0
    %1629 = vmatprep.subr.mxu0 0.0
    %1630 = vmatpush1.msra.mxu0 0.0
    %1631 = vmatprep.subr.mxu0 0.0
    %1632 = vmatpush1.msra.mxu0 0.0
    %1633 = vmatprep.subr.mxu0 0.0
    %1634 = vmatpush1.msra.mxu0 0.0
    %1635 = vmatprep.subr.mxu0 0.0
    %1636 = vmatpush1.msra.mxu0 0.0
    %1637 = vmatprep.subr.mxu0 0.0
    %1638 = vmatpush1.msra.mxu0 0.0
    %1639 = vmatprep.subr.mxu0 0.0
    %1640 = vmatpush1.msra.mxu0 0.0
    %1641 = vmatprep.subr.mxu0 0.0
    %1642 = vmatpush1.msra.mxu0 0.0
    %1643 = vmatprep.subr.mxu0 0.0
    %1644 = vmatpush1.msra.mxu0 0.0
    %1645 = vmatprep.subr.mxu0 0.0
    %1646 = vmatpush1.msra.mxu0 0.0
    %1647 = vmatprep.subr.mxu0 0.0
    %1648 = vmatpush1.msra.mxu0 0.0
    %1649 = vmatprep.subr.mxu0 0.0
    %1650 = vmatpush1.msra.mxu0 0.0
    %1651 = vmatprep.subr.mxu0 0.0
    %1652 = vmatpush1.msra.mxu0 0.0
    %1653 = vmatprep.subr.mxu0 0.0
    %1654 = vmatpush1.msra.mxu0 0.0
    %1655 = vmatprep.subr.mxu0 0.0
    %1656 = vmatpush1.msra.mxu0 0.0
    %1657 = vmatprep.subr.mxu0 0.0
    %1658 = vmatpush1.msra.mxu0 0.0
    %1659 = vmatprep.subr.mxu0 0.0
    %1660 = vmatpush1.msra.mxu0 0.0
    %1661 = vmatprep.subr.mxu0 0.0
    %1662 = vmatpush1.msra.mxu0 0.0
    %1663 = vmatprep.subr.mxu0 0.0
    %1664 = vmatpush1.msra.mxu0 0.0
    %1665 = vmatprep.subr.mxu0 0.0
    %1666 = vmatpush1.msra.mxu0 0.0
    %1667 = vmatprep.subr.mxu0 0.0
    %1668 = vmatpush1.msra.mxu0 0.0
    %1669 = vmatprep.subr.mxu0 0.0
    %1670 = vmatpush1.msra.mxu0 0.0
    %1671 = vmatprep.subr.mxu0 0.0
    %1672 = vmatpush1.msra.mxu0 0.0
    %1673 = vmatprep.subr.mxu0 0.0
    %1674 = vmatpush1.msra.mxu0 0.0
    %1675 = vmatprep.subr.mxu0 0.0
    %1676 = vmatpush1.msra.mxu0 0.0
    %1677 = vmatprep.subr.mxu0 0.0
    %1678 = vmatpush1.msra.mxu0 0.0
    %1679 = vmatprep.subr.mxu0 0.0
    %1680 = vmatpush1.msra.mxu0 0.0
    %1681 = vmatprep.mubr.f32.mxu0 0.0
    %1682 = vmatmul.mubr.f32.gmra.mrb[0].mxu0 %v1615
    %v1683 = vpop.f32.mrb[0].mxu0
    %v1684 = vadd.f32 0.0, %v1683
    %v1685 = vpop.f32.mrb[0].mxu0
    %1686 = vdwg.mxu0
    %s1687 = scalar_lea.vmem %s9, 8
    %v1688 = vld [vmem:[%s1687] sm:$0xff]
    %v1690 = vsel %vm1613, %v1688, 0
    %1692 = vmatprep.subr.mxu0 0.0
    %1693 = vmatpush1.msra.mxu0 %v1610
    %1694 = vmatprep.subr.mxu0 0.0
    %1695 = vmatpush1.msra.mxu0 %v1611
    %1696 = vmatprep.subr.mxu0 0.0
    %1697 = vmatpush1.msra.mxu0 0.0
    %1698 = vmatprep.subr.mxu0 0.0
    %1699 = vmatpush1.msra.mxu0 0.0
    %1700 = vmatprep.subr.mxu0 0.0
    %1701 = vmatpush1.msra.mxu0 0.0
    %1702 = vmatprep.subr.mxu0 0.0
    %1703 = vmatpush1.msra.mxu0 0.0
    %1704 = vmatprep.subr.mxu0 0.0
    %1705 = vmatpush1.msra.mxu0 0.0
    %1706 = vmatprep.subr.mxu0 0.0
    %1707 = vmatpush1.msra.mxu0 0.0
    %1708 = vmatprep.subr.mxu0 0.0
    %1709 = vmatpush1.msra.mxu0 0.0
    %1710 = vmatprep.subr.mxu0 0.0
    %1711 = vmatpush1.msra.mxu0 0.0
    %1712 = vmatprep.subr.mxu0 0.0
    %1713 = vmatpush1.msra.mxu0 0.0
    %1714 = vmatprep.subr.mxu0 0.0
    %1715 = vmatpush1.msra.mxu0 0.0
    %1716 = vmatprep.subr.mxu0 0.0
    %1717 = vmatpush1.msra.mxu0 0.0
    %1718 = vmatprep.subr.mxu0 0.0
    %1719 = vmatpush1.msra.mxu0 0.0
    %1720 = vmatprep.subr.mxu0 0.0
    %1721 = vmatpush1.msra.mxu0 0.0
    %1722 = vmatprep.subr.mxu0 0.0
    %1723 = vmatpush1.msra.mxu0 0.0
    %1724 = vmatprep.subr.mxu0 0.0
    %1725 = vmatpush1.msra.mxu0 0.0
    %1726 = vmatprep.subr.mxu0 0.0
    %1727 = vmatpush1.msra.mxu0 0.0
    %1728 = vmatprep.subr.mxu0 0.0
    %1729 = vmatpush1.msra.mxu0 0.0
    %1730 = vmatprep.subr.mxu0 0.0
    %1731 = vmatpush1.msra.mxu0 0.0
    %1732 = vmatprep.subr.mxu0 0.0
    %1733 = vmatpush1.msra.mxu0 0.0
    %1734 = vmatprep.subr.mxu0 0.0
    %1735 = vmatpush1.msra.mxu0 0.0
    %1736 = vmatprep.subr.mxu0 0.0
    %1737 = vmatpush1.msra.mxu0 0.0
    %1738 = vmatprep.subr.mxu0 0.0
    %1739 = vmatpush1.msra.mxu0 0.0
    %1740 = vmatprep.subr.mxu0 0.0
    %1741 = vmatpush1.msra.mxu0 0.0
    %1742 = vmatprep.subr.mxu0 0.0
    %1743 = vmatpush1.msra.mxu0 0.0
    %1744 = vmatprep.subr.mxu0 0.0
    %1745 = vmatpush1.msra.mxu0 0.0
    %1746 = vmatprep.subr.mxu0 0.0
    %1747 = vmatpush1.msra.mxu0 0.0
    %1748 = vmatprep.subr.mxu0 0.0
    %1749 = vmatpush1.msra.mxu0 0.0
    %1750 = vmatprep.subr.mxu0 0.0
    %1751 = vmatpush1.msra.mxu0 0.0
    %1752 = vmatprep.subr.mxu0 0.0
    %1753 = vmatpush1.msra.mxu0 0.0
    %1754 = vmatprep.subr.mxu0 0.0
    %1755 = vmatpush1.msra.mxu0 0.0
    %1756 = vmatprep.mubr.f32.mxu0 0.0
    %1757 = vmatmul.mubr.f32.gmra.mrb[0].mxu0 %v1690
    %v1758 = vpop.f32.mrb[0].mxu0
    %v1759 = vadd.f32 0.0, %v1758
    %v1760 = vpop.f32.mrb[0].mxu0
    %1761 = vdwg.mxu0
    %v1762 = vmax.f32 %v1684, %v1759
    %v1763 = vld [vmem:[%s10] sm:$0xff]
    %v1764 = vld [vmem:[%s10 + $0x8] sm:$0xff]
    %v1765 = vld [vmem:[%s10 + $0x10] sm:$0xff]
    %v1766 = vld [vmem:[%s10 + $0x18] sm:$0xff]
    %v1767 = vld [vmem:[%s10 + $0x20] sm:$0xff]
    %v1768 = vld [vmem:[%s10 + $0x28] sm:$0xff]
    %v1769 = vld [vmem:[%s10 + $0x30] sm:$0xff]
    %v1770 = vld [vmem:[%s10 + $0x38] sm:$0xff]
    %v1772 = vsel %vm901, %v1762, 0
    %1774 = vmatprep.subr.mxu0 0.0
    %1775 = vmatpush1.msra.mxu0 %v1763
    %1776 = vmatprep.subr.mxu0 0.0
    %1777 = vmatpush1.msra.mxu0 %v1764
    %1778 = vmatprep.subr.mxu0 0.0
    %1779 = vmatpush1.msra.mxu0 %v1765
    %1780 = vmatprep.subr.mxu0 0.0
    %1781 = vmatpush1.msra.mxu0 %v1766
    %1782 = vmatprep.subr.mxu0 0.0
    %1783 = vmatpush1.msra.mxu0 %v1767
    %1784 = vmatprep.subr.mxu0 0.0
    %1785 = vmatpush1.msra.mxu0 %v1768
    %1786 = vmatprep.subr.mxu0 0.0
    %1787 = vmatpush1.msra.mxu0 %v1769
    %1788 = vmatprep.subr.mxu0 0.0
    %1789 = vmatpush1.msra.mxu0 %v1770
    %1790 = vmatprep.subr.mxu0 0.0
    %1791 = vmatpush1.msra.mxu0 0.0
    %1792 = vmatprep.subr.mxu0 0.0
    %1793 = vmatpush1.msra.mxu0 0.0
    %1794 = vmatprep.subr.mxu0 0.0
    %1795 = vmatpush1.msra.mxu0 0.0
    %1796 = vmatprep.subr.mxu0 0.0
    %1797 = vmatpush1.msra.mxu0 0.0
    %1798 = vmatprep.subr.mxu0 0.0
    %1799 = vmatpush1.msra.mxu0 0.0
    %1800 = vmatprep.subr.mxu0 0.0
    %1801 = vmatpush1.msra.mxu0 0.0
    %1802 = vmatprep.subr.mxu0 0.0
    %1803 = vmatpush1.msra.mxu0 0.0
    %1804 = vmatprep.subr.mxu0 0.0
    %1805 = vmatpush1.msra.mxu0 0.0
    %1806 = vmatprep.subr.mxu0 0.0
    %1807 = vmatpush1.msra.mxu0 0.0
    %1808 = vmatprep.subr.mxu0 0.0
    %1809 = vmatpush1.msra.mxu0 0.0
    %1810 = vmatprep.subr.mxu0 0.0
    %1811 = vmatpush1.msra.mxu0 0.0
    %1812 = vmatprep.subr.mxu0 0.0
    %1813 = vmatpush1.msra.mxu0 0.0
    %1814 = vmatprep.subr.mxu0 0.0
    %1815 = vmatpush1.msra.mxu0 0.0
    %1816 = vmatprep.subr.mxu0 0.0
    %1817 = vmatpush1.msra.mxu0 0.0
    %1818 = vmatprep.subr.mxu0 0.0
    %1819 = vmatpush1.msra.mxu0 0.0
    %1820 = vmatprep.subr.mxu0 0.0
    %1821 = vmatpush1.msra.mxu0 0.0
    %1822 = vmatprep.subr.mxu0 0.0
    %1823 = vmatpush1.msra.mxu0 0.0
    %1824 = vmatprep.subr.mxu0 0.0
    %1825 = vmatpush1.msra.mxu0 0.0
    %1826 = vmatprep.subr.mxu0 0.0
    %1827 = vmatpush1.msra.mxu0 0.0
    %1828 = vmatprep.subr.mxu0 0.0
    %1829 = vmatpush1.msra.mxu0 0.0
    %1830 = vmatprep.subr.mxu0 0.0
    %1831 = vmatpush1.msra.mxu0 0.0
    %1832 = vmatprep.subr.mxu0 0.0
    %1833 = vmatpush1.msra.mxu0 0.0
    %1834 = vmatprep.subr.mxu0 0.0
    %1835 = vmatpush1.msra.mxu0 0.0
    %1836 = vmatprep.subr.mxu0 0.0
    %1837 = vmatpush1.msra.mxu0 0.0
    %1838 = vmatprep.mubr.f32.mxu0 0.0
    %1839 = vmatmul.mubr.f32.gmra.mrb[0].mxu0 %v1772
    %v1840 = vpop.f32.mrb[0].mxu0
    %v1841 = vadd.f32 0.0, %v1840
    %v1842 = vpop.f32.mrb[0].mxu0
    %1843 = vdwg.mxu0
    %s1844 = scalar_lea.vmem %s10, 64
    %v1845 = vld [vmem:[%s1844] sm:$0xff]
    %v1846 = vld [vmem:[%s1844 + $0x8] sm:$0xff]
    %v1847 = vld [vmem:[%s1844 + $0x10] sm:$0xff]
    %v1848 = vld [vmem:[%s1844 + $0x18] sm:$0xff]
    %v1849 = vld [vmem:[%s1844 + $0x20] sm:$0xff]
    %v1850 = vld [vmem:[%s1844 + $0x28] sm:$0xff]
    %v1851 = vld [vmem:[%s1844 + $0x30] sm:$0xff]
    %v1852 = vld [vmem:[%s1844 + $0x38] sm:$0xff]
    %1853 = vmatprep.subr.mxu0 0.0
    %1854 = vmatpush1.msra.mxu0 %v1845
    %1855 = vmatprep.subr.mxu0 0.0
    %1856 = vmatpush1.msra.mxu0 %v1846
    %1857 = vmatprep.subr.mxu0 0.0
    %1858 = vmatpush1.msra.mxu0 %v1847
    %1859 = vmatprep.subr.mxu0 0.0
    %1860 = vmatpush1.msra.mxu0 %v1848
    %1861 = vmatprep.subr.mxu0 0.0
    %1862 = vmatpush1.msra.mxu0 %v1849
    %1863 = vmatprep.subr.mxu0 0.0
    %1864 = vmatpush1.msra.mxu0 %v1850
    %1865 = vmatprep.subr.mxu0 0.0
    %1866 = vmatpush1.msra.mxu0 %v1851
    %1867 = vmatprep.subr.mxu0 0.0
    %1868 = vmatpush1.msra.mxu0 %v1852
    %1869 = vmatprep.subr.mxu0 0.0
    %1870 = vmatpush1.msra.mxu0 0.0
    %1871 = vmatprep.subr.mxu0 0.0
    %1872 = vmatpush1.msra.mxu0 0.0
    %1873 = vmatprep.subr.mxu0 0.0
    %1874 = vmatpush1.msra.mxu0 0.0
    %1875 = vmatprep.subr.mxu0 0.0
    %1876 = vmatpush1.msra.mxu0 0.0
    %1877 = vmatprep.subr.mxu0 0.0
    %1878 = vmatpush1.msra.mxu0 0.0
    %1879 = vmatprep.subr.mxu0 0.0
    %1880 = vmatpush1.msra.mxu0 0.0
    %1881 = vmatprep.subr.mxu0 0.0
    %1882 = vmatpush1.msra.mxu0 0.0
    %1883 = vmatprep.subr.mxu0 0.0
    %1884 = vmatpush1.msra.mxu0 0.0
    %1885 = vmatprep.subr.mxu0 0.0
    %1886 = vmatpush1.msra.mxu0 0.0
    %1887 = vmatprep.subr.mxu0 0.0
    %1888 = vmatpush1.msra.mxu0 0.0
    %1889 = vmatprep.subr.mxu0 0.0
    %1890 = vmatpush1.msra.mxu0 0.0
    %1891 = vmatprep.subr.mxu0 0.0
    %1892 = vmatpush1.msra.mxu0 0.0
    %1893 = vmatprep.subr.mxu0 0.0
    %1894 = vmatpush1.msra.mxu0 0.0
    %1895 = vmatprep.subr.mxu0 0.0
    %1896 = vmatpush1.msra.mxu0 0.0
    %1897 = vmatprep.subr.mxu0 0.0
    %1898 = vmatpush1.msra.mxu0 0.0
    %1899 = vmatprep.subr.mxu0 0.0
    %1900 = vmatpush1.msra.mxu0 0.0
    %1901 = vmatprep.subr.mxu0 0.0
    %1902 = vmatpush1.msra.mxu0 0.0
    %1903 = vmatprep.subr.mxu0 0.0
    %1904 = vmatpush1.msra.mxu0 0.0
    %1905 = vmatprep.subr.mxu0 0.0
    %1906 = vmatpush1.msra.mxu0 0.0
    %1907 = vmatprep.subr.mxu0 0.0
    %1908 = vmatpush1.msra.mxu0 0.0
    %1909 = vmatprep.subr.mxu0 0.0
    %1910 = vmatpush1.msra.mxu0 0.0
    %1911 = vmatprep.subr.mxu0 0.0
    %1912 = vmatpush1.msra.mxu0 0.0
    %1913 = vmatprep.subr.mxu0 0.0
    %1914 = vmatpush1.msra.mxu0 0.0
    %1915 = vmatprep.subr.mxu0 0.0
    %1916 = vmatpush1.msra.mxu0 0.0
    %1917 = vmatprep.mubr.f32.mxu0 0.0
    %1918 = vmatmul.mubr.f32.gmra.mrb[0].mxu0 %v1772
    %v1919 = vpop.f32.mrb[0].mxu0
    %v1920 = vadd.f32 0.0, %v1919
    %v1921 = vpop.f32.mrb[0].mxu0
    %1922 = vdwg.mxu0
    %v1923 = vmax.f32 %v1841, %v1920
    %v1924 = vld [vmem:[%s12] sm:$0x1]
    %v1925 = vld [vmem:[%s11] sm:$0xff]
    %v1926 = vld [vmem:[%s11 + $0x8] sm:$0xff]
    %v1927 = vld [vmem:[%s11 + $0x10] sm:$0xff]
    %v1928 = vld [vmem:[%s11 + $0x18] sm:$0xff]
    %v1930 = vsel %vm707, %v1923, 0
    %1932 = vmatprep.subr.mxu0 0.0
    %1933 = vmatpush1.msra.mxu0 %v1925
    %1934 = vmatprep.subr.mxu0 0.0
    %1935 = vmatpush1.msra.mxu0 %v1926
    %1936 = vmatprep.subr.mxu0 0.0
    %1937 = vmatpush1.msra.mxu0 %v1927
    %1938 = vmatprep.subr.mxu0 0.0
    %1939 = vmatpush1.msra.mxu0 %v1928
    %1940 = vmatprep.subr.mxu0 0.0
    %1941 = vmatpush1.msra.mxu0 0.0
    %1942 = vmatprep.subr.mxu0 0.0
    %1943 = vmatpush1.msra.mxu0 0.0
    %1944 = vmatprep.subr.mxu0 0.0
    %1945 = vmatpush1.msra.mxu0 0.0
    %1946 = vmatprep.subr.mxu0 0.0
    %1947 = vmatpush1.msra.mxu0 0.0
    %1948 = vmatprep.subr.mxu0 0.0
    %1949 = vmatpush1.msra.mxu0 0.0
    %1950 = vmatprep.subr.mxu0 0.0
    %1951 = vmatpush1.msra.mxu0 0.0
    %1952 = vmatprep.subr.mxu0 0.0
    %1953 = vmatpush1.msra.mxu0 0.0
    %1954 = vmatprep.subr.mxu0 0.0
    %1955 = vmatpush1.msra.mxu0 0.0
    %1956 = vmatprep.subr.mxu0 0.0
    %1957 = vmatpush1.msra.mxu0 0.0
    %1958 = vmatprep.subr.mxu0 0.0
    %1959 = vmatpush1.msra.mxu0 0.0
    %1960 = vmatprep.subr.mxu0 0.0
    %1961 = vmatpush1.msra.mxu0 0.0
    %1962 = vmatprep.subr.mxu0 0.0
    %1963 = vmatpush1.msra.mxu0 0.0
    %1964 = vmatprep.subr.mxu0 0.0
    %1965 = vmatpush1.msra.mxu0 0.0
    %1966 = vmatprep.subr.mxu0 0.0
    %1967 = vmatpush1.msra.mxu0 0.0
    %1968 = vmatprep.subr.mxu0 0.0
    %1969 = vmatpush1.msra.mxu0 0.0
    %1970 = vmatprep.subr.mxu0 0.0
    %1971 = vmatpush1.msra.mxu0 0.0
    %1972 = vmatprep.subr.mxu0 0.0
    %1973 = vmatpush1.msra.mxu0 0.0
    %1974 = vmatprep.subr.mxu0 0.0
    %1975 = vmatpush1.msra.mxu0 0.0
    %1976 = vmatprep.subr.mxu0 0.0
    %1977 = vmatpush1.msra.mxu0 0.0
    %1978 = vmatprep.subr.mxu0 0.0
    %1979 = vmatpush1.msra.mxu0 0.0
    %1980 = vmatprep.subr.mxu0 0.0
    %1981 = vmatpush1.msra.mxu0 0.0
    %1982 = vmatprep.subr.mxu0 0.0
    %1983 = vmatpush1.msra.mxu0 0.0
    %1984 = vmatprep.subr.mxu0 0.0
    %1985 = vmatpush1.msra.mxu0 0.0
    %1986 = vmatprep.subr.mxu0 0.0
    %1987 = vmatpush1.msra.mxu0 0.0
    %1988 = vmatprep.subr.mxu0 0.0
    %1989 = vmatpush1.msra.mxu0 0.0
    %1990 = vmatprep.subr.mxu0 0.0
    %1991 = vmatpush1.msra.mxu0 0.0
    %1992 = vmatprep.subr.mxu0 0.0
    %1993 = vmatpush1.msra.mxu0 0.0
    %1994 = vmatprep.subr.mxu0 0.0
    %1995 = vmatpush1.msra.mxu0 0.0
    %1996 = vmatprep.mubr.f32.mxu0 0.0
    %1997 = vmatmul.mubr.f32.gmra.mrb[0].mxu0 %v1930
    %v1998 = vpop.f32.mrb[0].mxu0
    %v1999 = vadd.f32 0.0, %v1998
    %v2000 = vpop.f32.mrb[0].mxu0
    %2001 = vdwg.mxu0
    %v2003 = vlaneseq
    %v2004 = vshrl.u32 %v2003, 7
    %v2005 = vsub.s32 0, %v2004
    %v2006 = vrot.slane %v1924, %v2005
    %v2008 = vadd.f32 %v2006, %v1999
    %s2009 = scalar_lea.vmem %s11, 32
    %v2010 = vld [vmem:[%s2009] sm:$0xff]
    %v2011 = vld [vmem:[%s2009 + $0x8] sm:$0xff]
    %v2012 = vld [vmem:[%s2009 + $0x10] sm:$0xff]
    %v2013 = vld [vmem:[%s2009 + $0x18] sm:$0xff]
    %v2014 = vrot.slane %v1923, 2
    %v2015 = vsel %vm707, %v2014, 0
    %2017 = vmatprep.subr.mxu0 0.0
    %2018 = vmatpush1.msra.mxu0 %v2010
    %2019 = vmatprep.subr.mxu0 0.0
    %2020 = vmatpush1.msra.mxu0 %v2011
    %2021 = vmatprep.subr.mxu0 0.0
    %2022 = vmatpush1.msra.mxu0 %v2012
    %2023 = vmatprep.subr.mxu0 0.0
    %2024 = vmatpush1.msra.mxu0 %v2013
    %2025 = vmatprep.subr.mxu0 0.0
    %2026 = vmatpush1.msra.mxu0 0.0
    %2027 = vmatprep.subr.mxu0 0.0
    %2028 = vmatpush1.msra.mxu0 0.0
    %2029 = vmatprep.subr.mxu0 0.0
    %2030 = vmatpush1.msra.mxu0 0.0
    %2031 = vmatprep.subr.mxu0 0.0
    %2032 = vmatpush1.msra.mxu0 0.0
    %2033 = vmatprep.subr.mxu0 0.0
    %2034 = vmatpush1.msra.mxu0 0.0
    %2035 = vmatprep.subr.mxu0 0.0
    %2036 = vmatpush1.msra.mxu0 0.0
    %2037 = vmatprep.subr.mxu0 0.0
    %2038 = vmatpush1.msra.mxu0 0.0
    %2039 = vmatprep.subr.mxu0 0.0
    %2040 = vmatpush1.msra.mxu0 0.0
    %2041 = vmatprep.subr.mxu0 0.0
    %2042 = vmatpush1.msra.mxu0 0.0
    %2043 = vmatprep.subr.mxu0 0.0
    %2044 = vmatpush1.msra.mxu0 0.0
    %2045 = vmatprep.subr.mxu0 0.0
    %2046 = vmatpush1.msra.mxu0 0.0
    %2047 = vmatprep.subr.mxu0 0.0
    %2048 = vmatpush1.msra.mxu0 0.0
    %2049 = vmatprep.subr.mxu0 0.0
    %2050 = vmatpush1.msra.mxu0 0.0
    %2051 = vmatprep.subr.mxu0 0.0
    %2052 = vmatpush1.msra.mxu0 0.0
    %2053 = vmatprep.subr.mxu0 0.0
    %2054 = vmatpush1.msra.mxu0 0.0
    %2055 = vmatprep.subr.mxu0 0.0
    %2056 = vmatpush1.msra.mxu0 0.0
    %2057 = vmatprep.subr.mxu0 0.0
    %2058 = vmatpush1.msra.mxu0 0.0
    %2059 = vmatprep.subr.mxu0 0.0
    %2060 = vmatpush1.msra.mxu0 0.0
    %2061 = vmatprep.subr.mxu0 0.0
    %2062 = vmatpush1.msra.mxu0 0.0
    %2063 = vmatprep.subr.mxu0 0.0
    %2064 = vmatpush1.msra.mxu0 0.0
    %2065 = vmatprep.subr.mxu0 0.0
    %2066 = vmatpush1.msra.mxu0 0.0
    %2067 = vmatprep.subr.mxu0 0.0
    %2068 = vmatpush1.msra.mxu0 0.0
    %2069 = vmatprep.subr.mxu0 0.0
    %2070 = vmatpush1.msra.mxu0 0.0
    %2071 = vmatprep.subr.mxu0 0.0
    %2072 = vmatpush1.msra.mxu0 0.0
    %2073 = vmatprep.subr.mxu0 0.0
    %2074 = vmatpush1.msra.mxu0 0.0
    %2075 = vmatprep.subr.mxu0 0.0
    %2076 = vmatpush1.msra.mxu0 0.0
    %2077 = vmatprep.subr.mxu0 0.0
    %2078 = vmatpush1.msra.mxu0 0.0
    %2079 = vmatprep.subr.mxu0 0.0
    %2080 = vmatpush1.msra.mxu0 0.0
    %2081 = vmatprep.mubr.f32.mxu0 0.0
    %2082 = vmatmul.mubr.f32.gmra.mrb[0].mxu0 %v2015
    %v2083 = vpop.f32.mrb[0].mxu0
    %v2084 = vadd.f32 0.0, %v2083
    %v2085 = vpop.f32.mrb[0].mxu0
    %2086 = vdwg.mxu0
    %v2087 = vadd.f32 %v2008, %v2084
    %s2088 = scalar_lea.vmem %s11, 64
    %v2089 = vld [vmem:[%s2088] sm:$0xff]
    %v2090 = vld [vmem:[%s2088 + $0x8] sm:$0xff]
    %v2091 = vld [vmem:[%s2088 + $0x10] sm:$0xff]
    %v2092 = vld [vmem:[%s2088 + $0x18] sm:$0xff]
    %v2093 = vrot.slane %v1923, 4
    %v2094 = vsel %vm707, %v2093, 0
    %2096 = vmatprep.subr.mxu0 0.0
    %2097 = vmatpush1.msra.mxu0 %v2089
    %2098 = vmatprep.subr.mxu0 0.0
    %2099 = vmatpush1.msra.mxu0 %v2090
    %2100 = vmatprep.subr.mxu0 0.0
    %2101 = vmatpush1.msra.mxu0 %v2091
    %2102 = vmatprep.subr.mxu0 0.0
    %2103 = vmatpush1.msra.mxu0 %v2092
    %2104 = vmatprep.subr.mxu0 0.0
    %2105 = vmatpush1.msra.mxu0 0.0
    %2106 = vmatprep.subr.mxu0 0.0
    %2107 = vmatpush1.msra.mxu0 0.0
    %2108 = vmatprep.subr.mxu0 0.0
    %2109 = vmatpush1.msra.mxu0 0.0
    %2110 = vmatprep.subr.mxu0 0.0
    %2111 = vmatpush1.msra.mxu0 0.0
    %2112 = vmatprep.subr.mxu0 0.0
    %2113 = vmatpush1.msra.mxu0 0.0
    %2114 = vmatprep.subr.mxu0 0.0
    %2115 = vmatpush1.msra.mxu0 0.0
    %2116 = vmatprep.subr.mxu0 0.0
    %2117 = vmatpush1.msra.mxu0 0.0
    %2118 = vmatprep.subr.mxu0 0.0
    %2119 = vmatpush1.msra.mxu0 0.0
    %2120 = vmatprep.subr.mxu0 0.0
    %2121 = vmatpush1.msra.mxu0 0.0
    %2122 = vmatprep.subr.mxu0 0.0
    %2123 = vmatpush1.msra.mxu0 0.0
    %2124 = vmatprep.subr.mxu0 0.0
    %2125 = vmatpush1.msra.mxu0 0.0
    %2126 = vmatprep.subr.mxu0 0.0
    %2127 = vmatpush1.msra.mxu0 0.0
    %2128 = vmatprep.subr.mxu0 0.0
    %2129 = vmatpush1.msra.mxu0 0.0
    %2130 = vmatprep.subr.mxu0 0.0
    %2131 = vmatpush1.msra.mxu0 0.0
    %2132 = vmatprep.subr.mxu0 0.0
    %2133 = vmatpush1.msra.mxu0 0.0
    %2134 = vmatprep.subr.mxu0 0.0
    %2135 = vmatpush1.msra.mxu0 0.0
    %2136 = vmatprep.subr.mxu0 0.0
    %2137 = vmatpush1.msra.mxu0 0.0
    %2138 = vmatprep.subr.mxu0 0.0
    %2139 = vmatpush1.msra.mxu0 0.0
    %2140 = vmatprep.subr.mxu0 0.0
    %2141 = vmatpush1.msra.mxu0 0.0
    %2142 = vmatprep.subr.mxu0 0.0
    %2143 = vmatpush1.msra.mxu0 0.0
    %2144 = vmatprep.subr.mxu0 0.0
    %2145 = vmatpush1.msra.mxu0 0.0
    %2146 = vmatprep.subr.mxu0 0.0
    %2147 = vmatpush1.msra.mxu0 0.0
    %2148 = vmatprep.subr.mxu0 0.0
    %2149 = vmatpush1.msra.mxu0 0.0
    %2150 = vmatprep.subr.mxu0 0.0
    %2151 = vmatpush1.msra.mxu0 0.0
    %2152 = vmatprep.subr.mxu0 0.0
    %2153 = vmatpush1.msra.mxu0 0.0
    %2154 = vmatprep.subr.mxu0 0.0
    %2155 = vmatpush1.msra.mxu0 0.0
    %2156 = vmatprep.subr.mxu0 0.0
    %2157 = vmatpush1.msra.mxu0 0.0
    %2158 = vmatprep.subr.mxu0 0.0
    %2159 = vmatpush1.msra.mxu0 0.0
    %2160 = vmatprep.mubr.f32.mxu0 0.0
    %2161 = vmatmul.mubr.f32.gmra.mrb[0].mxu0 %v2094
    %v2162 = vpop.f32.mrb[0].mxu0
    %v2163 = vadd.f32 0.0, %v2162
    %v2164 = vpop.f32.mrb[0].mxu0
    %2165 = vdwg.mxu0
    %v2166 = vadd.f32 %v2087, %v2163
    %s2167 = scalar_lea.vmem %s11, 96
    %v2168 = vld [vmem:[%s2167] sm:$0xff]
    %v2169 = vld [vmem:[%s2167 + $0x8] sm:$0xff]
    %v2170 = vld [vmem:[%s2167 + $0x10] sm:$0xff]
    %v2171 = vld [vmem:[%s2167 + $0x18] sm:$0xff]
    %v2172 = vrot.slane %v1923, 6
    %v2173 = vsel %vm707, %v2172, 0
    %2175 = vmatprep.subr.mxu0 0.0
    %2176 = vmatpush1.msra.mxu0 %v2168
    %2177 = vmatprep.subr.mxu0 0.0
    %2178 = vmatpush1.msra.mxu0 %v2169
    %2179 = vmatprep.subr.mxu0 0.0
    %2180 = vmatpush1.msra.mxu0 %v2170
    %2181 = vmatprep.subr.mxu0 0.0
    %2182 = vmatpush1.msra.mxu0 %v2171
    %2183 = vmatprep.subr.mxu0 0.0
    %2184 = vmatpush1.msra.mxu0 0.0
    %2185 = vmatprep.subr.mxu0 0.0
    %2186 = vmatpush1.msra.mxu0 0.0
    %2187 = vmatprep.subr.mxu0 0.0
    %2188 = vmatpush1.msra.mxu0 0.0
    %2189 = vmatprep.subr.mxu0 0.0
    %2190 = vmatpush1.msra.mxu0 0.0
    %2191 = vmatprep.subr.mxu0 0.0
    %2192 = vmatpush1.msra.mxu0 0.0
    %2193 = vmatprep.subr.mxu0 0.0
    %2194 = vmatpush1.msra.mxu0 0.0
    %2195 = vmatprep.subr.mxu0 0.0
    %2196 = vmatpush1.msra.mxu0 0.0
    %2197 = vmatprep.subr.mxu0 0.0
    %2198 = vmatpush1.msra.mxu0 0.0
    %2199 = vmatprep.subr.mxu0 0.0
    %2200 = vmatpush1.msra.mxu0 0.0
    %2201 = vmatprep.subr.mxu0 0.0
    %2202 = vmatpush1.msra.mxu0 0.0
    %2203 = vmatprep.subr.mxu0 0.0
    %2204 = vmatpush1.msra.mxu0 0.0
    %2205 = vmatprep.subr.mxu0 0.0
    %2206 = vmatpush1.msra.mxu0 0.0
    %2207 = vmatprep.subr.mxu0 0.0
    %2208 = vmatpush1.msra.mxu0 0.0
    %2209 = vmatprep.subr.mxu0 0.0
    %2210 = vmatpush1.msra.mxu0 0.0
    %2211 = vmatprep.subr.mxu0 0.0
    %2212 = vmatpush1.msra.mxu0 0.0
    %2213 = vmatprep.subr.mxu0 0.0
    %2214 = vmatpush1.msra.mxu0 0.0
    %2215 = vmatprep.subr.mxu0 0.0
    %2216 = vmatpush1.msra.mxu0 0.0
    %2217 = vmatprep.subr.mxu0 0.0
    %2218 = vmatpush1.msra.mxu0 0.0
    %2219 = vmatprep.subr.mxu0 0.0
    %2220 = vmatpush1.msra.mxu0 0.0
    %2221 = vmatprep.subr.mxu0 0.0
    %2222 = vmatpush1.msra.mxu0 0.0
    %2223 = vmatprep.subr.mxu0 0.0
    %2224 = vmatpush1.msra.mxu0 0.0
    %2225 = vmatprep.subr.mxu0 0.0
    %2226 = vmatpush1.msra.mxu0 0.0
    %2227 = vmatprep.subr.mxu0 0.0
    %2228 = vmatpush1.msra.mxu0 0.0
    %2229 = vmatprep.subr.mxu0 0.0
    %2230 = vmatpush1.msra.mxu0 0.0
    %2231 = vmatprep.subr.mxu0 0.0
    %2232 = vmatpush1.msra.mxu0 0.0
    %2233 = vmatprep.subr.mxu0 0.0
    %2234 = vmatpush1.msra.mxu0 0.0
    %2235 = vmatprep.subr.mxu0 0.0
    %2236 = vmatpush1.msra.mxu0 0.0
    %2237 = vmatprep.subr.mxu0 0.0
    %2238 = vmatpush1.msra.mxu0 0.0
    %2239 = vmatprep.mubr.f32.mxu0 0.0
    %2240 = vmatmul.mubr.f32.gmra.mrb[0].mxu0 %v2173
    %v2241 = vpop.f32.mrb[0].mxu0
    %v2242 = vadd.f32 0.0, %v2241
    %v2243 = vpop.f32.mrb[0].mxu0
    %2244 = vdwg.mxu0
    %v2245 = vadd.f32 %v2166, %v2242
    %v2246 = vmax.f32 %v2245, 0.0
    %v2247 = vld [vmem:[%s13] sm:$0xff]
    %v2248 = vld [vmem:[%s13 + $0x8] sm:$0xff]
    %v2249 = vld [vmem:[%s13 + $0x10] sm:$0xff]
    %v2250 = vld [vmem:[%s13 + $0x18] sm:$0xff]
    %v2251 = vld [vmem:[%s14] sm:$0x1]
    %v2253 = vlaneseq
    %v2254 = vshrl.u32 %v2253, 7
    %v2255 = vsub.s32 0, %v2254
    %v2256 = vrot.slane %v2251, %v2255
    %v2259 = vsel %vm707, %v2246, 0
    %2261 = vmatprep.subr.mxu0 0.0
    %2262 = vmatpush1.msra.mxu0 %v2247
    %2263 = vmatprep.subr.mxu0 0.0
    %2264 = vmatpush1.msra.mxu0 %v2248
    %2265 = vmatprep.subr.mxu0 0.0
    %2266 = vmatpush1.msra.mxu0 %v2249
    %2267 = vmatprep.subr.mxu0 0.0
    %2268 = vmatpush1.msra.mxu0 %v2250
    %2269 = vmatprep.subr.mxu0 0.0
    %2270 = vmatpush1.msra.mxu0 0.0
    %2271 = vmatprep.subr.mxu0 0.0
    %2272 = vmatpush1.msra.mxu0 0.0
    %2273 = vmatprep.subr.mxu0 0.0
    %2274 = vmatpush1.msra.mxu0 0.0
    %2275 = vmatprep.subr.mxu0 0.0
    %2276 = vmatpush1.msra.mxu0 0.0
    %2277 = vmatprep.subr.mxu0 0.0
    %2278 = vmatpush1.msra.mxu0 0.0
    %2279 = vmatprep.subr.mxu0 0.0
    %2280 = vmatpush1.msra.mxu0 0.0
    %2281 = vmatprep.subr.mxu0 0.0
    %2282 = vmatpush1.msra.mxu0 0.0
    %2283 = vmatprep.subr.mxu0 0.0
    %2284 = vmatpush1.msra.mxu0 0.0
    %2285 = vmatprep.subr.mxu0 0.0
    %2286 = vmatpush1.msra.mxu0 0.0
    %2287 = vmatprep.subr.mxu0 0.0
    %2288 = vmatpush1.msra.mxu0 0.0
    %2289 = vmatprep.subr.mxu0 0.0
    %2290 = vmatpush1.msra.mxu0 0.0
    %2291 = vmatprep.subr.mxu0 0.0
    %2292 = vmatpush1.msra.mxu0 0.0
    %2293 = vmatprep.subr.mxu0 0.0
    %2294 = vmatpush1.msra.mxu0 0.0
    %2295 = vmatprep.subr.mxu0 0.0
    %2296 = vmatpush1.msra.mxu0 0.0
    %2297 = vmatprep.subr.mxu0 0.0
    %2298 = vmatpush1.msra.mxu0 0.0
    %2299 = vmatprep.subr.mxu0 0.0
    %2300 = vmatpush1.msra.mxu0 0.0
    %2301 = vmatprep.subr.mxu0 0.0
    %2302 = vmatpush1.msra.mxu0 0.0
    %2303 = vmatprep.subr.mxu0 0.0
    %2304 = vmatpush1.msra.mxu0 0.0
    %2305 = vmatprep.subr.mxu0 0.0
    %2306 = vmatpush1.msra.mxu0 0.0
    %2307 = vmatprep.subr.mxu0 0.0
    %2308 = vmatpush1.msra.mxu0 0.0
    %2309 = vmatprep.subr.mxu0 0.0
    %2310 = vmatpush1.msra.mxu0 0.0
    %2311 = vmatprep.subr.mxu0 0.0
    %2312 = vmatpush1.msra.mxu0 0.0
    %2313 = vmatprep.subr.mxu0 0.0
    %2314 = vmatpush1.msra.mxu0 0.0
    %2315 = vmatprep.subr.mxu0 0.0
    %2316 = vmatpush1.msra.mxu0 0.0
    %2317 = vmatprep.subr.mxu0 0.0
    %2318 = vmatpush1.msra.mxu0 0.0
    %2319 = vmatprep.subr.mxu0 0.0
    %2320 = vmatpush1.msra.mxu0 0.0
    %2321 = vmatprep.subr.mxu0 0.0
    %2322 = vmatpush1.msra.mxu0 0.0
    %2323 = vmatprep.subr.mxu0 0.0
    %2324 = vmatpush1.msra.mxu0 0.0
    %2325 = vmatprep.mubr.f32.mxu0 0.0
    %2326 = vmatmul.mubr.f32.gmra.mrb[0].mxu0 %v2259
    %v2327 = vpop.f32.mrb[0].mxu0
    %v2328 = vadd.f32 %v2256, %v2327
    %v2329 = vpop.f32.mrb[0].mxu0
    %2330 = vdwg.mxu0
    %v2331 = vmax.f32 %v2328, 0.0
    %v2332 = vld [vmem:[%s15] sm:$0xff]
    %v2333 = vld [vmem:[%s15 + $0x8] sm:$0xff]
    %v2334 = vld [vmem:[%s15 + $0x10] sm:$0xff]
    %v2335 = vld [vmem:[%s15 + $0x18] sm:$0xff]
    %v2336 = vld [vmem:[%s16] sm:$0x1]
    %v2338 = vlaneseq
    %v2339 = vshrl.u32 %v2338, 7
    %v2340 = vsub.s32 0, %v2339
    %v2341 = vrot.slane %v2336, %v2340
    %v2344 = vsel %vm707, %v2331, 0
    %2346 = vmatprep.subr.mxu0 0.0
    %2347 = vmatpush1.msra.mxu0 %v2332
    %2348 = vmatprep.subr.mxu0 0.0
    %2349 = vmatpush1.msra.mxu0 %v2333
    %2350 = vmatprep.subr.mxu0 0.0
    %2351 = vmatpush1.msra.mxu0 %v2334
    %2352 = vmatprep.subr.mxu0 0.0
    %2353 = vmatpush1.msra.mxu0 %v2335
    %2354 = vmatprep.subr.mxu0 0.0
    %2355 = vmatpush1.msra.mxu0 0.0
    %2356 = vmatprep.subr.mxu0 0.0
    %2357 = vmatpush1.msra.mxu0 0.0
    %2358 = vmatprep.subr.mxu0 0.0
    %2359 = vmatpush1.msra.mxu0 0.0
    %2360 = vmatprep.subr.mxu0 0.0
    %2361 = vmatpush1.msra.mxu0 0.0
    %2362 = vmatprep.subr.mxu0 0.0
    %2363 = vmatpush1.msra.mxu0 0.0
    %2364 = vmatprep.subr.mxu0 0.0
    %2365 = vmatpush1.msra.mxu0 0.0
    %2366 = vmatprep.subr.mxu0 0.0
    %2367 = vmatpush1.msra.mxu0 0.0
    %2368 = vmatprep.subr.mxu0 0.0
    %2369 = vmatpush1.msra.mxu0 0.0
    %2370 = vmatprep.subr.mxu0 0.0
    %2371 = vmatpush1.msra.mxu0 0.0
    %2372 = vmatprep.subr.mxu0 0.0
    %2373 = vmatpush1.msra.mxu0 0.0
    %2374 = vmatprep.subr.mxu0 0.0
    %2375 = vmatpush1.msra.mxu0 0.0
    %2376 = vmatprep.subr.mxu0 0.0
    %2377 = vmatpush1.msra.mxu0 0.0
    %2378 = vmatprep.subr.mxu0 0.0
    %2379 = vmatpush1.msra.mxu0 0.0
    %2380 = vmatprep.subr.mxu0 0.0
    %2381 = vmatpush1.msra.mxu0 0.0
    %2382 = vmatprep.subr.mxu0 0.0
    %2383 = vmatpush1.msra.mxu0 0.0
    %2384 = vmatprep.subr.mxu0 0.0
    %2385 = vmatpush1.msra.mxu0 0.0
    %2386 = vmatprep.subr.mxu0 0.0
    %2387 = vmatpush1.msra.mxu0 0.0
    %2388 = vmatprep.subr.mxu0 0.0
    %2389 = vmatpush1.msra.mxu0 0.0
    %2390 = vmatprep.subr.mxu0 0.0
    %2391 = vmatpush1.msra.mxu0 0.0
    %2392 = vmatprep.subr.mxu0 0.0
    %2393 = vmatpush1.msra.mxu0 0.0
    %2394 = vmatprep.subr.mxu0 0.0
    %2395 = vmatpush1.msra.mxu0 0.0
    %2396 = vmatprep.subr.mxu0 0.0
    %2397 = vmatpush1.msra.mxu0 0.0
    %2398 = vmatprep.subr.mxu0 0.0
    %2399 = vmatpush1.msra.mxu0 0.0
    %2400 = vmatprep.subr.mxu0 0.0
    %2401 = vmatpush1.msra.mxu0 0.0
    %2402 = vmatprep.subr.mxu0 0.0
    %2403 = vmatpush1.msra.mxu0 0.0
    %2404 = vmatprep.subr.mxu0 0.0
    %2405 = vmatpush1.msra.mxu0 0.0
    %2406 = vmatprep.subr.mxu0 0.0
    %2407 = vmatpush1.msra.mxu0 0.0
    %2408 = vmatprep.subr.mxu0 0.0
    %2409 = vmatpush1.msra.mxu0 0.0
    %2410 = vmatprep.mubr.f32.mxu0 0.0
    %2411 = vmatmul.mubr.f32.gmra.mrb[0].mxu0 %v2344
    %v2412 = vpop.f32.mrb[0].mxu0
    %v2413 = vadd.f32 %v2341, %v2412
    %v2414 = vpop.f32.mrb[0].mxu0
    %2415 = vdwg.mxu0
    %vm2416 = vcmask 74752
    %2417 = vst.msk [vmem:[#allocation2] sm:$0x3] %vm2416, %v2413
    // Predicated region
    $region70: #{mnist_forward.1} parent=1 // pred_check
      _
    $region71: #{mnist_forward.1} parent=1 // pred_check_branch
      %2419 = sbr.rel (0) target = $region73
    $region72: #{mnist_forward.1} parent=1 // pred_region
      %s2421 = ssub.s32 32, 32
      %2422 = vsyncadd [#allocation3], %s2421
      %s2424 = sshll.u32 [#allocation2], 4
      %s2425 = int_to_ptr.vmem [resolvable:$true] %s2424
      %2427 = dma.vmem_to_hbm [thread:$0]  %s2425, 32, %s17, [#allocation3]
    $region73: #{mnist_forward.1} parent=1 // pred_fallthru
      _
    // Predicated region
    $region74: #{mnist_forward.1} parent=1 // pred_check
      _
    $region75: #{mnist_forward.1} parent=1 // pred_check_branch
      %2429 = sbr.rel (0) target = $region77
    $region76: #{mnist_forward.1} parent=1 // pred_region
      %2430 = dma.done [#allocation3], 32
    $region77: #{mnist_forward.1} parent=1 // pred_fallthru
      _
    %2431 = vsyncpa [#allocation3], 1

</llo_original>
